<compile_context>
chip_gen: v7x
topology: tpu7x:2x2x1
jax: 0.10.0
libtpu: 0.0.40
codegen_flags: <defaults>
</compile_context>

<pallas_src>
import math
from functools import partial

import jax
import jax.numpy as jnp
import numpy as np
from jax.experimental import pallas as pl
from jax.experimental.pallas import tpu as pltpu

_SQRT2_INV = 1.0 / math.sqrt(2.0)
_LN_EPS = 1e-5
_VMEM_LIMIT = 64 * 1024 * 1024  # re-derive (shrink tiles) for v7x's 64 MiB VMEM if needed


def _round_up(x, m):
    return (x + m - 1) // m * m


def _row_tile(n, tm_max=256):
    """Row tile: multiple of 8, capped at tm_max (256..512 is near HBM roofline)."""
    return _round_up(n, 8) if n <= tm_max else tm_max


def _compiler_params():
    return pltpu.CompilerParams(
        dimension_semantics=("parallel",),
        vmem_limit_bytes=_VMEM_LIMIT,
    )


def _layernorm_f32(x):
    """torch F.layer_norm over last dim, no affine, eps=1e-5 (x already f32)."""
    mean = jnp.mean(x, axis=-1, keepdims=True)
    var = jnp.mean((x - mean) ** 2, axis=-1, keepdims=True)
    return (x - mean) * jax.lax.rsqrt(var + _LN_EPS)


# ----------------------------------------------------------------------------
# Pallas kernels
# ----------------------------------------------------------------------------

def _linear_kernel(x_ref, w_ref, b_ref, o_ref):
    """o = x @ w + b for one row tile; w, b resident across the grid."""
    o_ref[...] = (
        jnp.dot(x_ref[...], w_ref[...], preferred_element_type=jnp.float32)
        + b_ref[...]
    ).astype(o_ref.dtype)


def _ln_mlp_residual_kernel(h_ref, w1_ref, b1_ref, w2_ref, b2_ref, o_ref):
    """o = h + GELU(LN(h) @ w1 + b1) @ w2 + b2  (exact erf GELU), one row tile."""
    h = h_ref[...].astype(jnp.float32)
    hn = _layernorm_f32(h)
    z = jnp.dot(hn, w1_ref[...], preferred_element_type=jnp.float32) + b1_ref[...]
    g = 0.5 * z * (1.0 + jax.lax.erf(z * _SQRT2_INV))
    y = jnp.dot(g, w2_ref[...], preferred_element_type=jnp.float32) + b2_ref[...]
    o_ref[...] = (h + y).astype(o_ref.dtype)


def _attn_block_kernel(h_ref, qkvw_ref, qkvb_ref, outw_ref, outb_ref, o_ref,
                       *, num_heads, head_dim):
    """Fused attention sub-block for one batch element.

    h_ref: (S, C). qkv weights are column-permuted so the QKV activation layout is
    [Q_h0 | ... | Q_h{nh-1} | K_h0 | ... | V_h{nh-1}], each slice head_dim wide.
    Computes o = h + OutProj(Attention(LN(h))).
    """
    h = h_ref[...].astype(jnp.float32)                      # (S, C)
    hn = _layernorm_f32(h)
    qkv = (
        jnp.dot(hn, qkvw_ref[...], preferred_element_type=jnp.float32)
        + qkvb_ref[...]
    )                                                       # (S, 3*nh*hc)
    D = num_heads * head_dim
    scale = 1.0 / math.sqrt(head_dim)

    heads = []
    for hix in range(num_heads):                            # static unrolled loop
        lo = hix * head_dim
        q = qkv[:, lo:lo + head_dim] * scale                # scale on q: S*D mults
        k = qkv[:, D + lo:D + lo + head_dim]
        v = qkv[:, 2 * D + lo:2 * D + lo + head_dim]
        s = jnp.dot(q, k.T, preferred_element_type=jnp.float32)   # (S, S)
        m = jnp.max(s, axis=-1, keepdims=True)
        p = jnp.exp(s - m)
        l = jnp.sum(p, axis=-1, keepdims=True)
        r = pl.reciprocal(l, approx=True)                   # EUP slot
        r = r * (2.0 - l * r)                               # one Newton step -> full accuracy
        heads.append(jnp.dot(p, v, preferred_element_type=jnp.float32) * r)

    a = jnp.concatenate(heads, axis=-1)                     # (S, nh*hc) lane-dense
    y = (
        jnp.dot(a, outw_ref[...], preferred_element_type=jnp.float32)
        + outb_ref[...]
    )
    o_ref[...] = (h + y).astype(o_ref.dtype)                # fused residual, lane-dense store


# ----------------------------------------------------------------------------
# Pallas call wrappers
# ----------------------------------------------------------------------------

def pallas_linear(x2d, w, b, *, tm_max=256):
    """Row-tiled y = x @ w + b over (N, K) @ (K, M); weights resident across the grid."""
    N, K = x2d.shape
    M = w.shape[1]
    tm = _row_tile(N, tm_max)
    Np = _round_up(N, tm)
    xp = jnp.pad(x2d, ((0, Np - N), (0, 0))) if Np != N else x2d
    out = pl.pallas_call(
        _linear_kernel,
        out_shape=jax.ShapeDtypeStruct((Np, M), x2d.dtype),
        grid=(Np // tm,),
        in_specs=[
            pl.BlockSpec((tm, K), lambda i: (i, 0)),
            pl.BlockSpec((K, M), lambda i: (0, 0)),
            pl.BlockSpec((1, M), lambda i: (0, 0)),
        ],
        out_specs=pl.BlockSpec((tm, M), lambda i: (i, 0)),
        compiler_params=_compiler_params(),
    )(xp, w, b.reshape(1, M))
    return out[:N] if Np != N else out


def pallas_ln_mlp_residual(h2d, w1, b1, w2, b2, *, tm_max=256):
    """Row-tiled fused h + MLP(LN(h)); weights resident across the grid."""
    N, C = h2d.shape
    H = w1.shape[1]
    tm = _row_tile(N, tm_max)
    Np = _round_up(N, tm)
    hp = jnp.pad(h2d, ((0, Np - N), (0, 0))) if Np != N else h2d
    out = pl.pallas_call(
        _ln_mlp_residual_kernel,
        out_shape=jax.ShapeDtypeStruct((Np, C), h2d.dtype),
        grid=(Np // tm,),
        in_specs=[
            pl.BlockSpec((tm, C), lambda i: (i, 0)),
            pl.BlockSpec((C, H), lambda i: (0, 0)),
            pl.BlockSpec((1, H), lambda i: (0, 0)),
            pl.BlockSpec((H, C), lambda i: (0, 0)),
            pl.BlockSpec((1, C), lambda i: (0, 0)),
        ],
        out_specs=pl.BlockSpec((tm, C), lambda i: (i, 0)),
        compiler_params=_compiler_params(),
    )(hp, w1, b1.reshape(1, H), w2, b2.reshape(1, C))
    return out[:N] if Np != N else out


def pallas_attention_block(h, qkv_w, qkv_b, out_w, out_b, *, num_heads, head_dim):
    """Fused LN -> QKV -> multi-head attention -> out-proj -> residual. Grid over batch."""
    B, S, C = h.shape
    D = num_heads * head_dim
    D3 = 3 * D
    kernel = partial(_attn_block_kernel, num_heads=num_heads, head_dim=head_dim)
    return pl.pallas_call(
        kernel,
        out_shape=jax.ShapeDtypeStruct((B, S, C), h.dtype),
        grid=(B,),
        in_specs=[
            pl.BlockSpec((None, S, C), lambda b: (b, 0, 0)),   # one batch, full seq
            pl.BlockSpec((C, D3), lambda b: (0, 0)),           # weights resident
            pl.BlockSpec((1, D3), lambda b: (0, 0)),
            pl.BlockSpec((D, C), lambda b: (0, 0)),
            pl.BlockSpec((1, C), lambda b: (0, 0)),
        ],
        out_specs=pl.BlockSpec((None, S, C), lambda b: (b, 0, 0)),
        compiler_params=_compiler_params(),
    )(h, qkv_w, qkv_b.reshape(1, D3), out_w, out_b.reshape(1, C))


# ----------------------------------------------------------------------------
# Parameters (init in PyTorch layout, pack/permute once for the Pallas path)
# ----------------------------------------------------------------------------

def _init_linear(key, fan_in, fan_out, dtype=jnp.float32):
    """Mimics nn.Linear's uniform(-1/sqrt(fan_in), ...); weight stored (fan_in, fan_out)."""
    kw, kb = jax.random.split(key)
    bound = 1.0 / math.sqrt(fan_in)
    w = jax.random.uniform(kw, (fan_in, fan_out), dtype, -bound, bound)
    b = jax.random.uniform(kb, (fan_out,), dtype, -bound, bound)
    return w, b


def init_transformer_params(key, in_channels, out_channels, hidden_channels,
                            num_blocks, num_heads):
    hc = hidden_channels // num_heads   # per-head size (increase_hidden_channels=1)
    keys = jax.random.split(key, 2 + num_blocks)
    w_in, b_in = _init_linear(keys[0], in_channels, hidden_channels)
    w_out, b_out = _init_linear(keys[1], hidden_channels, out_channels)
    blocks = []
    for i in range(num_blocks):
        bk = jax.random.split(keys[2 + i], 4)
        qkv_w, qkv_b = _init_linear(bk[0], hidden_channels, 3 * hc * num_heads)
        ow, ob = _init_linear(bk[1], hc * num_heads, hidden_channels)
        w1, b1 = _init_linear(bk[2], hidden_channels, 2 * hidden_channels)
        w2, b2 = _init_linear(bk[3], 2 * hidden_channels, hidden_channels)
        blocks.append(dict(qkv_w=qkv_w, qkv_b=qkv_b, out_w=ow, out_b=ob,
                           w1=w1, b1=b1, w2=w2, b2=b2))
    return dict(w_in=w_in, b_in=b_in, w_out=w_out, b_out=b_out, blocks=blocks,
                num_heads=num_heads, head_dim=hc)


def pack_params_for_pallas(params):
    """Permute QKV columns so the fused kernel sees [Q_h0..|K_h0..|V_h0..] (head-major, hc
    contiguous), eliminating all activation transposes. Matches the module's
    '(qkv hc nh)' factorization with nh innermost."""
    nh, hc = params["num_heads"], params["head_dim"]
    # original column (qkv, d, h) = qkv*hc*nh + d*nh + h  ->  new column order (qkv, h, d)
    perm = jnp.asarray(
        np.arange(3 * hc * nh).reshape(3, hc, nh).transpose(0, 2, 1).reshape(-1))
    packed_blocks = []
    for blk in params["blocks"]:
        packed_blocks.append(dict(
            qkv_w=blk["qkv_w"][:, perm],
            qkv_b=blk["qkv_b"][perm],
            out_w=blk["out_w"], out_b=blk["out_b"],
            w1=blk["w1"], b1=blk["b1"], w2=blk["w2"], b2=blk["b2"],
        ))
    return dict(w_in=params["w_in"], b_in=params["b_in"],
                w_out=params["w_out"], b_out=params["b_out"],
                blocks=packed_blocks, num_heads=nh, head_dim=hc)


# ----------------------------------------------------------------------------
# Forward
# ----------------------------------------------------------------------------

def transformer_forward_pallas(pparams, x):
    """x: (B, S, in_channels) -> (B, S, out_channels)."""
    B, S, Cin = x.shape
    nh, hc = pparams["num_heads"], pparams["head_dim"]
    C = pparams["w_in"].shape[1]

    h = pallas_linear(x.reshape(B * S, Cin), pparams["w_in"], pparams["b_in"])
    h = h.reshape(B, S, C)

    for blk in pparams["blocks"]:
        # attention sub-block (LN + QKV + attention + out-proj + residual fused)
        h = pallas_attention_block(h, blk["qkv_w"], blk["qkv_b"],
                                   blk["out_w"], blk["out_b"],
                                   num_heads=nh, head_dim=hc)
        # MLP sub-block (LN + MLP + residual fused)
        h = pallas_ln_mlp_residual(h.reshape(B * S, C),
                                   blk["w1"], blk["b1"],
                                   blk["w2"], blk["b2"]).reshape(B, S, C)

    out = pallas_linear(h.reshape(B * S, C), pparams["w_out"], pparams["b_out"])
    return out.reshape(B, S, -1)


# ----------------------------------------------------------------------------
# Pure-JAX reference (semantics of the PyTorch forward, original weight layout)
# ----------------------------------------------------------------------------

def _ref_layernorm(x):
    mean = jnp.mean(x, axis=-1, keepdims=True)
    var = jnp.mean((x - mean) ** 2, axis=-1, keepdims=True)
    return (x - mean) * jax.lax.rsqrt(var + _LN_EPS)


def transformer_forward_ref(params, x):
    B, S, _ = x.shape
    nh, hc = params["num_heads"], params["head_dim"]
    h = x @ params["w_in"] + params["b_in"]
    for blk in params["blocks"]:
        hn = _ref_layernorm(h)
        qkv = hn @ blk["qkv_w"] + blk["qkv_b"]
        # '... items (qkv hc nh) -> qkv ... nh items hc'
        qkv = qkv.reshape(B, S, 3, hc, nh).transpose(2, 0, 4, 1, 3)
        q, k, v = qkv[0], qkv[1], qkv[2]
        s = jnp.einsum("bhqd,bhkd->bhqk", q, k) / math.sqrt(hc)
        p = jax.nn.softmax(s, axis=-1)
        a = jnp.einsum("bhqk,bhkd->bhqd", p, v)
        a = a.transpose(0, 2, 1, 3).reshape(B, S, nh * hc)
        h = h + (a @ blk["out_w"] + blk["out_b"])
        hn = _ref_layernorm(h)
        m = jax.nn.gelu(hn @ blk["w1"] + blk["b1"], approximate=False)
        h = h + (m @ blk["w2"] + blk["b2"])
    return h @ params["w_out"] + params["b_out"]


# ----------------------------------------------------------------------------
# Main
# ----------------------------------------------------------------------------

if __name__ == "__main__":
    # Small shapes consistent with the module's forward signature (..., num_items, channels).
    B, S = 2, 8
    in_channels, hidden_channels, out_channels = 16, 32, 8
    num_blocks, num_heads = 2, 4   # head_dim = 32 // 4 = 8

    key = jax.random.PRNGKey(0)
    kp, kx = jax.random.split(key)
    params = init_transformer_params(kp, in_channels, out_channels,
                                     hidden_channels, num_blocks, num_heads)
    pparams = pack_params_for_pallas(params)
    x = jax.random.normal(kx, (B, S, in_channels), dtype=jnp.float32)

    out = jax.block_until_ready(
        jax.jit(partial(transformer_forward_pallas, pparams))(x)
    )
    ref = jax.block_until_ready(transformer_forward_ref(params, x))

    np.testing.assert_allclose(np.asarray(out), np.asarray(ref),
                               rtol=1e-4, atol=1e-4)
    assert out.shape == (B, S, out_channels)
    print("KERNEL_OK")
</pallas_src>

<mosaic_0001>
module attributes {stable_mosaic.version = 11 : i64} {
  func.func @_linear_kernel(%arg0: i32, %arg1: memref<16x32xf32, #tpu.memory_space<vmem>>, %arg2: memref<32x8xf32, #tpu.memory_space<vmem>>, %arg3: memref<1x8xf32, #tpu.memory_space<vmem>>, %arg4: memref<16x8xf32, #tpu.memory_space<vmem>>) attributes {dimension_semantics = [#tpu.dimension_semantics<parallel>], iteration_bounds = array<i64: 1>, scalar_prefetch = 0 : i64, scratch_operands = 0 : i64, tpu.core_type = #tpu.core_type<tc>, window_params = [{transform_indices = @transform_0, window_bounds = array<i64: 16, 32>}, {pipeline_mode = #tpu.pipeline_mode<synchronous>, transform_indices = @transform_1, window_bounds = array<i64: 32, 8>}, {pipeline_mode = #tpu.pipeline_mode<synchronous>, transform_indices = @transform_2, window_bounds = array<i64: 1, 8>}, {transform_indices = @transform_3, window_bounds = array<i64: 16, 8>}]} {
    %c0 = arith.constant 0 : index
    %c0_0 = arith.constant 0 : index
    %0 = vector.load %arg1[%c0, %c0_0] : memref<16x32xf32, #tpu.memory_space<vmem>>, vector<16x32xf32>
    %c0_1 = arith.constant 0 : index
    %c0_2 = arith.constant 0 : index
    %1 = vector.load %arg2[%c0_1, %c0_2] : memref<32x8xf32, #tpu.memory_space<vmem>>, vector<32x8xf32>
    %cst = arith.constant dense<0.000000e+00> : vector<16x8xf32>
    %2 = tpu.matmul %0, %1, %cst {dimension_numbers = #tpu.dot_dimension_numbers<[1], [0], [0], [1], [0, 0, 1, 1], [], []>} : vector<16x32xf32>, vector<32x8xf32>, vector<16x8xf32> -> vector<16x8xf32>
    %c0_3 = arith.constant 0 : index
    %c0_4 = arith.constant 0 : index
    %3 = vector.load %arg3[%c0_3, %c0_4] : memref<1x8xf32, #tpu.memory_space<vmem>>, vector<1x8xf32>
    %4 = vector.broadcast %3 : vector<1x8xf32> to vector<16x8xf32>
    %5 = arith.addf %2, %4 : vector<16x8xf32>
    %c0_5 = arith.constant 0 : index
    %c0_6 = arith.constant 0 : index
    %6 = vector.load %arg4[%c0_5, %c0_6] : memref<16x8xf32, #tpu.memory_space<vmem>>, vector<16x8xf32>
    tpu.vector_store %arg4[%c0_5, %c0_6], %5 {strides = array<i32>} : memref<16x8xf32, #tpu.memory_space<vmem>>, vector<16x8xf32>,
    return
  }
  func.func @transform_0(%arg0: i32) -> (i32, i32) {
    %c0_i32 = arith.constant 0 : i32
    %c0_i32_0 = arith.constant 0 : i32
    return %arg0, %c0_i32 : i32, i32
  }
  func.func @transform_1(%arg0: i32) -> (i32, i32) {
    %c0_i32 = arith.constant 0 : i32
    %c0_i32_0 = arith.constant 0 : i32
    %c0_i32_1 = arith.constant 0 : i32
    return %c0_i32, %c0_i32_0 : i32, i32
  }
  func.func @transform_2(%arg0: i32) -> (i32, i32) {
    %c0_i32 = arith.constant 0 : i32
    %c0_i32_0 = arith.constant 0 : i32
    %c0_i32_1 = arith.constant 0 : i32
    return %c0_i32, %c0_i32_0 : i32, i32
  }
  func.func @transform_3(%arg0: i32) -> (i32, i32) {
    %c0_i32 = arith.constant 0 : i32
    %c0_i32_0 = arith.constant 0 : i32
    return %arg0, %c0_i32 : i32, i32
  }
}

module attributes {stable_mosaic.version = 11 : i64} {
  func.func @_attn_block_kernel(%arg0: i32, %arg1: memref<1x8x32xf32, #tpu.memory_space<vmem>>, %arg2: memref<32x96xf32, #tpu.memory_space<vmem>>, %arg3: memref<1x96xf32, #tpu.memory_space<vmem>>, %arg4: memref<32x32xf32, #tpu.memory_space<vmem>>, %arg5: memref<1x32xf32, #tpu.memory_space<vmem>>, %arg6: memref<1x8x32xf32, #tpu.memory_space<vmem>>) attributes {dimension_semantics = [#tpu.dimension_semantics<parallel>], iteration_bounds = array<i64: 2>, scalar_prefetch = 0 : i64, scratch_operands = 0 : i64, tpu.core_type = #tpu.core_type<tc>, window_params = [{transform_indices = @transform_0, window_bounds = array<i64: 1, 8, 32>}, {pipeline_mode = #tpu.pipeline_mode<synchronous>, transform_indices = @transform_1, window_bounds = array<i64: 32, 96>}, {pipeline_mode = #tpu.pipeline_mode<synchronous>, transform_indices = @transform_2, window_bounds = array<i64: 1, 96>}, {pipeline_mode = #tpu.pipeline_mode<synchronous>, transform_indices = @transform_3, window_bounds = array<i64: 32, 32>}, {pipeline_mode = #tpu.pipeline_mode<synchronous>, transform_indices = @transform_4, window_bounds = array<i64: 1, 32>}, {transform_indices = @transform_5, window_bounds = array<i64: 1, 8, 32>}]} {
    %c0 = arith.constant 0 : index
    %c0_0 = arith.constant 0 : index
    %c0_1 = arith.constant 0 : index
    %0 = vector.load %arg1[%c0, %c0_0, %c0_1] : memref<1x8x32xf32, #tpu.memory_space<vmem>>, vector<1x8x32xf32>
    %1 = vector.shape_cast %0 : vector<1x8x32xf32> to vector<8x32xf32>
    %cst = arith.constant dense<0.000000e+00> : vector<8xf32>
    %2 = vector.multi_reduction <add>, %1, %cst [1] : vector<8x32xf32> to vector<8xf32>
    %3 = vector.shape_cast %2 : vector<8xf32> to vector<8x1xf32>
    %cst_2 = arith.constant 3.200000e+01 : f32
    %4 = vector.broadcast %cst_2 : f32 to vector<8x1xf32>
    %5 = arith.divf %3, %4 : vector<8x1xf32>
    %6 = vector.broadcast %5 : vector<8x1xf32> to vector<8x32xf32>
    %7 = arith.subf %1, %6 : vector<8x32xf32>
    %8 = arith.mulf %7, %7 : vector<8x32xf32>
    %cst_3 = arith.constant dense<0.000000e+00> : vector<8xf32>
    %9 = vector.multi_reduction <add>, %8, %cst_3 [1] : vector<8x32xf32> to vector<8xf32>
    %10 = vector.shape_cast %9 : vector<8xf32> to vector<8x1xf32>
    %cst_4 = arith.constant 3.200000e+01 : f32
    %11 = vector.broadcast %cst_4 : f32 to vector<8x1xf32>
    %12 = arith.divf %10, %11 : vector<8x1xf32>
    %13 = vector.broadcast %5 : vector<8x1xf32> to vector<8x32xf32>
    %14 = arith.subf %1, %13 : vector<8x32xf32>
    %cst_5 = arith.constant 9.99999974E-6 : f32
    %15 = vector.broadcast %cst_5 : f32 to vector<8x1xf32>
    %16 = arith.addf %12, %15 : vector<8x1xf32>
    %17 = math.rsqrt %16 : vector<8x1xf32>
    %18 = vector.broadcast %17 : vector<8x1xf32> to vector<8x32xf32>
    %19 = arith.mulf %14, %18 : vector<8x32xf32>
    %c0_6 = arith.constant 0 : index
    %c0_7 = arith.constant 0 : index
    %20 = vector.load %arg2[%c0_6, %c0_7] : memref<32x96xf32, #tpu.memory_space<vmem>>, vector<32x96xf32>
    %cst_8 = arith.constant dense<0.000000e+00> : vector<8x96xf32>
    %21 = tpu.matmul %19, %20, %cst_8 {dimension_numbers = #tpu.dot_dimension_numbers<[1], [0], [0], [1], [0, 0, 1, 1], [], []>} : vector<8x32xf32>, vector<32x96xf32>, vector<8x96xf32> -> vector<8x96xf32>
    %c0_9 = arith.constant 0 : index
    %c0_10 = arith.constant 0 : index
    %22 = vector.load %arg3[%c0_9, %c0_10] : memref<1x96xf32, #tpu.memory_space<vmem>>, vector<1x96xf32>
    %23 = vector.broadcast %22 : vector<1x96xf32> to vector<8x96xf32>
    %24 = arith.addf %21, %23 : vector<8x96xf32>
    %25 = vector.extract_strided_slice %24 {offsets = [0, 0], sizes = [8, 8], strides = [1, 1]} : vector<8x96xf32> to vector<8x8xf32>
    %cst_11 = arith.constant 0.353553385 : f32
    %26 = vector.broadcast %cst_11 : f32 to vector<8x8xf32>
    %27 = arith.mulf %25, %26 : vector<8x8xf32>
    %28 = vector.extract_strided_slice %24 {offsets = [0, 32], sizes = [8, 8], strides = [1, 1]} : vector<8x96xf32> to vector<8x8xf32>
    %29 = vector.extract_strided_slice %24 {offsets = [0, 64], sizes = [8, 8], strides = [1, 1]} : vector<8x96xf32> to vector<8x8xf32>
    %30 = tpu.transpose %28, [1, 0] : vector<8x8xf32> -> vector<8x8xf32>
    %cst_12 = arith.constant dense<0.000000e+00> : vector<8x8xf32>
    %31 = tpu.matmul %27, %30, %cst_12 {dimension_numbers = #tpu.dot_dimension_numbers<[1], [0], [0], [1], [0, 0, 1, 1], [], []>} : vector<8x8xf32>, vector<8x8xf32>, vector<8x8xf32> -> vector<8x8xf32>
    %cst_13 = arith.constant dense<0xFF800000> : vector<8xf32>
    %32 = vector.multi_reduction <maximumf>, %31, %cst_13 [1] : vector<8x8xf32> to vector<8xf32>
    %33 = vector.shape_cast %32 : vector<8xf32> to vector<8x1xf32>
    %34 = vector.broadcast %33 : vector<8x1xf32> to vector<8x8xf32>
    %35 = arith.subf %31, %34 : vector<8x8xf32>
    %36 = math.exp %35 : vector<8x8xf32>
    %cst_14 = arith.constant dense<0.000000e+00> : vector<8xf32>
    %37 = vector.multi_reduction <add>, %36, %cst_14 [1] : vector<8x8xf32> to vector<8xf32>
    %38 = vector.shape_cast %37 : vector<8xf32> to vector<8x1xf32>
    %39 = tpu.reciprocal %38 {approx = true} : vector<8x1xf32> -> vector<8x1xf32>
    %40 = arith.mulf %38, %39 : vector<8x1xf32>
    %cst_15 = arith.constant 2.000000e+00 : f32
    %41 = vector.broadcast %cst_15 : f32 to vector<8x1xf32>
    %42 = arith.subf %41, %40 : vector<8x1xf32>
    %43 = arith.mulf %39, %42 : vector<8x1xf32>
    %cst_16 = arith.constant dense<0.000000e+00> : vector<8x8xf32>
    %44 = tpu.matmul %36, %29, %cst_16 {dimension_numbers = #tpu.dot_dimension_numbers<[1], [0], [0], [1], [0, 0, 1, 1], [], []>} : vector<8x8xf32>, vector<8x8xf32>, vector<8x8xf32> -> vector<8x8xf32>
    %45 = vector.broadcast %43 : vector<8x1xf32> to vector<8x8xf32>
    %46 = arith.mulf %44, %45 : vector<8x8xf32>
    %47 = vector.extract_strided_slice %24 {offsets = [0, 8], sizes = [8, 8], strides = [1, 1]} : vector<8x96xf32> to vector<8x8xf32>
    %cst_17 = arith.constant 0.353553385 : f32
    %48 = vector.broadcast %cst_17 : f32 to vector<8x8xf32>
    %49 = arith.mulf %47, %48 : vector<8x8xf32>
    %50 = vector.extract_strided_slice %24 {offsets = [0, 40], sizes = [8, 8], strides = [1, 1]} : vector<8x96xf32> to vector<8x8xf32>
    %51 = vector.extract_strided_slice %24 {offsets = [0, 72], sizes = [8, 8], strides = [1, 1]} : vector<8x96xf32> to vector<8x8xf32>
    %52 = tpu.transpose %50, [1, 0] : vector<8x8xf32> -> vector<8x8xf32>
    %cst_18 = arith.constant dense<0.000000e+00> : vector<8x8xf32>
    %53 = tpu.matmul %49, %52, %cst_18 {dimension_numbers = #tpu.dot_dimension_numbers<[1], [0], [0], [1], [0, 0, 1, 1], [], []>} : vector<8x8xf32>, vector<8x8xf32>, vector<8x8xf32> -> vector<8x8xf32>
    %cst_19 = arith.constant dense<0xFF800000> : vector<8xf32>
    %54 = vector.multi_reduction <maximumf>, %53, %cst_19 [1] : vector<8x8xf32> to vector<8xf32>
    %55 = vector.shape_cast %54 : vector<8xf32> to vector<8x1xf32>
    %56 = vector.broadcast %55 : vector<8x1xf32> to vector<8x8xf32>
    %57 = arith.subf %53, %56 : vector<8x8xf32>
    %58 = math.exp %57 : vector<8x8xf32>
    %cst_20 = arith.constant dense<0.000000e+00> : vector<8xf32>
    %59 = vector.multi_reduction <add>, %58, %cst_20 [1] : vector<8x8xf32> to vector<8xf32>
    %60 = vector.shape_cast %59 : vector<8xf32> to vector<8x1xf32>
    %61 = tpu.reciprocal %60 {approx = true} : vector<8x1xf32> -> vector<8x1xf32>
    %62 = arith.mulf %60, %61 : vector<8x1xf32>
    %cst_21 = arith.constant 2.000000e+00 : f32
    %63 = vector.broadcast %cst_21 : f32 to vector<8x1xf32>
    %64 = arith.subf %63, %62 : vector<8x1xf32>
    %65 = arith.mulf %61, %64 : vector<8x1xf32>
    %cst_22 = arith.constant dense<0.000000e+00> : vector<8x8xf32>
    %66 = tpu.matmul %58, %51, %cst_22 {dimension_numbers = #tpu.dot_dimension_numbers<[1], [0], [0], [1], [0, 0, 1, 1], [], []>} : vector<8x8xf32>, vector<8x8xf32>, vector<8x8xf32> -> vector<8x8xf32>
    %67 = vector.broadcast %65 : vector<8x1xf32> to vector<8x8xf32>
    %68 = arith.mulf %66, %67 : vector<8x8xf32>
    %69 = vector.extract_strided_slice %24 {offsets = [0, 16], sizes = [8, 8], strides = [1, 1]} : vector<8x96xf32> to vector<8x8xf32>
    %cst_23 = arith.constant 0.353553385 : f32
    %70 = vector.broadcast %cst_23 : f32 to vector<8x8xf32>
    %71 = arith.mulf %69, %70 : vector<8x8xf32>
    %72 = vector.extract_strided_slice %24 {offsets = [0, 48], sizes = [8, 8], strides = [1, 1]} : vector<8x96xf32> to vector<8x8xf32>
    %73 = vector.extract_strided_slice %24 {offsets = [0, 80], sizes = [8, 8], strides = [1, 1]} : vector<8x96xf32> to vector<8x8xf32>
    %74 = tpu.transpose %72, [1, 0] : vector<8x8xf32> -> vector<8x8xf32>
    %cst_24 = arith.constant dense<0.000000e+00> : vector<8x8xf32>
    %75 = tpu.matmul %71, %74, %cst_24 {dimension_numbers = #tpu.dot_dimension_numbers<[1], [0], [0], [1], [0, 0, 1, 1], [], []>} : vector<8x8xf32>, vector<8x8xf32>, vector<8x8xf32> -> vector<8x8xf32>
    %cst_25 = arith.constant dense<0xFF800000> : vector<8xf32>
    %76 = vector.multi_reduction <maximumf>, %75, %cst_25 [1] : vector<8x8xf32> to vector<8xf32>
    %77 = vector.shape_cast %76 : vector<8xf32> to vector<8x1xf32>
    %78 = vector.broadcast %77 : vector<8x1xf32> to vector<8x8xf32>
    %79 = arith.subf %75, %78 : vector<8x8xf32>
    %80 = math.exp %79 : vector<8x8xf32>
    %cst_26 = arith.constant dense<0.000000e+00> : vector<8xf32>
    %81 = vector.multi_reduction <add>, %80, %cst_26 [1] : vector<8x8xf32> to vector<8xf32>
    %82 = vector.shape_cast %81 : vector<8xf32> to vector<8x1xf32>
    %83 = tpu.reciprocal %82 {approx = true} : vector<8x1xf32> -> vector<8x1xf32>
    %84 = arith.mulf %82, %83 : vector<8x1xf32>
    %cst_27 = arith.constant 2.000000e+00 : f32
    %85 = vector.broadcast %cst_27 : f32 to vector<8x1xf32>
    %86 = arith.subf %85, %84 : vector<8x1xf32>
    %87 = arith.mulf %83, %86 : vector<8x1xf32>
    %cst_28 = arith.constant dense<0.000000e+00> : vector<8x8xf32>
    %88 = tpu.matmul %80, %73, %cst_28 {dimension_numbers = #tpu.dot_dimension_numbers<[1], [0], [0], [1], [0, 0, 1, 1], [], []>} : vector<8x8xf32>, vector<8x8xf32>, vector<8x8xf32> -> vector<8x8xf32>
    %89 = vector.broadcast %87 : vector<8x1xf32> to vector<8x8xf32>
    %90 = arith.mulf %88, %89 : vector<8x8xf32>
    %91 = vector.extract_strided_slice %24 {offsets = [0, 24], sizes = [8, 8], strides = [1, 1]} : vector<8x96xf32> to vector<8x8xf32>
    %cst_29 = arith.constant 0.353553385 : f32
    %92 = vector.broadcast %cst_29 : f32 to vector<8x8xf32>
    %93 = arith.mulf %91, %92 : vector<8x8xf32>
    %94 = vector.extract_strided_slice %24 {offsets = [0, 56], sizes = [8, 8], strides = [1, 1]} : vector<8x96xf32> to vector<8x8xf32>
    %95 = vector.extract_strided_slice %24 {offsets = [0, 88], sizes = [8, 8], strides = [1, 1]} : vector<8x96xf32> to vector<8x8xf32>
    %96 = tpu.transpose %94, [1, 0] : vector<8x8xf32> -> vector<8x8xf32>
    %cst_30 = arith.constant dense<0.000000e+00> : vector<8x8xf32>
    %97 = tpu.matmul %93, %96, %cst_30 {dimension_numbers = #tpu.dot_dimension_numbers<[1], [0], [0], [1], [0, 0, 1, 1], [], []>} : vector<8x8xf32>, vector<8x8xf32>, vector<8x8xf32> -> vector<8x8xf32>
    %cst_31 = arith.constant dense<0xFF800000> : vector<8xf32>
    %98 = vector.multi_reduction <maximumf>, %97, %cst_31 [1] : vector<8x8xf32> to vector<8xf32>
    %99 = vector.shape_cast %98 : vector<8xf32> to vector<8x1xf32>
    %100 = vector.broadcast %99 : vector<8x1xf32> to vector<8x8xf32>
    %101 = arith.subf %97, %100 : vector<8x8xf32>
    %102 = math.exp %101 : vector<8x8xf32>
    %cst_32 = arith.constant dense<0.000000e+00> : vector<8xf32>
    %103 = vector.multi_reduction <add>, %102, %cst_32 [1] : vector<8x8xf32> to vector<8xf32>
    %104 = vector.shape_cast %103 : vector<8xf32> to vector<8x1xf32>
    %105 = tpu.reciprocal %104 {approx = true} : vector<8x1xf32> -> vector<8x1xf32>
    %106 = arith.mulf %104, %105 : vector<8x1xf32>
    %cst_33 = arith.constant 2.000000e+00 : f32
    %107 = vector.broadcast %cst_33 : f32 to vector<8x1xf32>
    %108 = arith.subf %107, %106 : vector<8x1xf32>
    %109 = arith.mulf %105, %108 : vector<8x1xf32>
    %cst_34 = arith.constant dense<0.000000e+00> : vector<8x8xf32>
    %110 = tpu.matmul %102, %95, %cst_34 {dimension_numbers = #tpu.dot_dimension_numbers<[1], [0], [0], [1], [0, 0, 1, 1], [], []>} : vector<8x8xf32>, vector<8x8xf32>, vector<8x8xf32> -> vector<8x8xf32>
    %111 = vector.broadcast %109 : vector<8x1xf32> to vector<8x8xf32>
    %112 = arith.mulf %110, %111 : vector<8x8xf32>
    %113 = tpu.concatenate %46, %68, %90, %112 in 1 : vector<8x8xf32>, vector<8x8xf32>, vector<8x8xf32>, vector<8x8xf32> -> vector<8x32xf32>
    %c0_35 = arith.constant 0 : index
    %c0_36 = arith.constant 0 : index
    %114 = vector.load %arg4[%c0_35, %c0_36] : memref<32x32xf32, #tpu.memory_space<vmem>>, vector<32x32xf32>
    %cst_37 = arith.constant dense<0.000000e+00> : vector<8x32xf32>
    %115 = tpu.matmul %113, %114, %cst_37 {dimension_numbers = #tpu.dot_dimension_numbers<[1], [0], [0], [1], [0, 0, 1, 1], [], []>} : vector<8x32xf32>, vector<32x32xf32>, vector<8x32xf32> -> vector<8x32xf32>
    %c0_38 = arith.constant 0 : index
    %c0_39 = arith.constant 0 : index
    %116 = vector.load %arg5[%c0_38, %c0_39] : memref<1x32xf32, #tpu.memory_space<vmem>>, vector<1x32xf32>
    %117 = vector.broadcast %116 : vector<1x32xf32> to vector<8x32xf32>
    %118 = arith.addf %115, %117 : vector<8x32xf32>
    %119 = arith.addf %1, %118 : vector<8x32xf32>
    %c0_40 = arith.constant 0 : index
    %c0_41 = arith.constant 0 : index
    %c0_42 = arith.constant 0 : index
    %120 = vector.load %arg6[%c0_40, %c0_41, %c0_42] : memref<1x8x32xf32, #tpu.memory_space<vmem>>, vector<1x8x32xf32>
    %121 = vector.shape_cast %120 : vector<1x8x32xf32> to vector<8x32xf32>
    %122 = vector.shape_cast %119 : vector<8x32xf32> to vector<1x8x32xf32>
    tpu.vector_store %arg6[%c0_40, %c0_41, %c0_42], %122 {strides = array<i32>} : memref<1x8x32xf32, #tpu.memory_space<vmem>>, vector<1x8x32xf32>,
    return
  }
  func.func @transform_0(%arg0: i32) -> (i32, i32, i32) {
    %c0_i32 = arith.constant 0 : i32
    %c0_i32_0 = arith.constant 0 : i32
    %c0_i32_1 = arith.constant 0 : i32
    return %arg0, %c0_i32, %c0_i32_0 : i32, i32, i32
  }
  func.func @transform_1(%arg0: i32) -> (i32, i32) {
    %c0_i32 = arith.constant 0 : i32
    %c0_i32_0 = arith.constant 0 : i32
    %c0_i32_1 = arith.constant 0 : i32
    return %c0_i32, %c0_i32_0 : i32, i32
  }
  func.func @transform_2(%arg0: i32) -> (i32, i32) {
    %c0_i32 = arith.constant 0 : i32
    %c0_i32_0 = arith.constant 0 : i32
    %c0_i32_1 = arith.constant 0 : i32
    return %c0_i32, %c0_i32_0 : i32, i32
  }
  func.func @transform_3(%arg0: i32) -> (i32, i32) {
    %c0_i32 = arith.constant 0 : i32
    %c0_i32_0 = arith.constant 0 : i32
    %c0_i32_1 = arith.constant 0 : i32
    return %c0_i32, %c0_i32_0 : i32, i32
  }
  func.func @transform_4(%arg0: i32) -> (i32, i32) {
    %c0_i32 = arith.constant 0 : i32
    %c0_i32_0 = arith.constant 0 : i32
    %c0_i32_1 = arith.constant 0 : i32
    return %c0_i32, %c0_i32_0 : i32, i32
  }
  func.func @transform_5(%arg0: i32) -> (i32, i32, i32) {
    %c0_i32 = arith.constant 0 : i32
    %c0_i32_0 = arith.constant 0 : i32
    %c0_i32_1 = arith.constant 0 : i32
    return %arg0, %c0_i32, %c0_i32_0 : i32, i32, i32
  }
}

module attributes {stable_mosaic.version = 11 : i64} {
  func.func @_linear_kernel(%arg0: i32, %arg1: memref<16x16xf32, #tpu.memory_space<vmem>>, %arg2: memref<16x32xf32, #tpu.memory_space<vmem>>, %arg3: memref<1x32xf32, #tpu.memory_space<vmem>>, %arg4: memref<16x32xf32, #tpu.memory_space<vmem>>) attributes {dimension_semantics = [#tpu.dimension_semantics<parallel>], iteration_bounds = array<i64: 1>, scalar_prefetch = 0 : i64, scratch_operands = 0 : i64, tpu.core_type = #tpu.core_type<tc>, window_params = [{transform_indices = @transform_0, window_bounds = array<i64: 16, 16>}, {pipeline_mode = #tpu.pipeline_mode<synchronous>, transform_indices = @transform_1, window_bounds = array<i64: 16, 32>}, {pipeline_mode = #tpu.pipeline_mode<synchronous>, transform_indices = @transform_2, window_bounds = array<i64: 1, 32>}, {transform_indices = @transform_3, window_bounds = array<i64: 16, 32>}]} {
    %c0 = arith.constant 0 : index
    %c0_0 = arith.constant 0 : index
    %0 = vector.load %arg1[%c0, %c0_0] : memref<16x16xf32, #tpu.memory_space<vmem>>, vector<16x16xf32>
    %c0_1 = arith.constant 0 : index
    %c0_2 = arith.constant 0 : index
    %1 = vector.load %arg2[%c0_1, %c0_2] : memref<16x32xf32, #tpu.memory_space<vmem>>, vector<16x32xf32>
    %cst = arith.constant dense<0.000000e+00> : vector<16x32xf32>
    %2 = tpu.matmul %0, %1, %cst {dimension_numbers = #tpu.dot_dimension_numbers<[1], [0], [0], [1], [0, 0, 1, 1], [], []>} : vector<16x16xf32>, vector<16x32xf32>, vector<16x32xf32> -> vector<16x32xf32>
    %c0_3 = arith.constant 0 : index
    %c0_4 = arith.constant 0 : index
    %3 = vector.load %arg3[%c0_3, %c0_4] : memref<1x32xf32, #tpu.memory_space<vmem>>, vector<1x32xf32>
    %4 = vector.broadcast %3 : vector<1x32xf32> to vector<16x32xf32>
    %5 = arith.addf %2, %4 : vector<16x32xf32>
    %c0_5 = arith.constant 0 : index
    %c0_6 = arith.constant 0 : index
    %6 = vector.load %arg4[%c0_5, %c0_6] : memref<16x32xf32, #tpu.memory_space<vmem>>, vector<16x32xf32>
    tpu.vector_store %arg4[%c0_5, %c0_6], %5 {strides = array<i32>} : memref<16x32xf32, #tpu.memory_space<vmem>>, vector<16x32xf32>,
    return
  }
  func.func @transform_0(%arg0: i32) -> (i32, i32) {
    %c0_i32 = arith.constant 0 : i32
    %c0_i32_0 = arith.constant 0 : i32
    return %arg0, %c0_i32 : i32, i32
  }
  func.func @transform_1(%arg0: i32) -> (i32, i32) {
    %c0_i32 = arith.constant 0 : i32
    %c0_i32_0 = arith.constant 0 : i32
    %c0_i32_1 = arith.constant 0 : i32
    return %c0_i32, %c0_i32_0 : i32, i32
  }
  func.func @transform_2(%arg0: i32) -> (i32, i32) {
    %c0_i32 = arith.constant 0 : i32
    %c0_i32_0 = arith.constant 0 : i32
    %c0_i32_1 = arith.constant 0 : i32
    return %c0_i32, %c0_i32_0 : i32, i32
  }
  func.func @transform_3(%arg0: i32) -> (i32, i32) {
    %c0_i32 = arith.constant 0 : i32
    %c0_i32_0 = arith.constant 0 : i32
    return %arg0, %c0_i32 : i32, i32
  }
}

module attributes {stable_mosaic.version = 11 : i64} {
  func.func @_ln_mlp_residual_kernel(%arg0: i32, %arg1: memref<16x32xf32, #tpu.memory_space<vmem>>, %arg2: memref<32x64xf32, #tpu.memory_space<vmem>>, %arg3: memref<1x64xf32, #tpu.memory_space<vmem>>, %arg4: memref<64x32xf32, #tpu.memory_space<vmem>>, %arg5: memref<1x32xf32, #tpu.memory_space<vmem>>, %arg6: memref<16x32xf32, #tpu.memory_space<vmem>>) attributes {dimension_semantics = [#tpu.dimension_semantics<parallel>], iteration_bounds = array<i64: 1>, scalar_prefetch = 0 : i64, scratch_operands = 0 : i64, tpu.core_type = #tpu.core_type<tc>, window_params = [{transform_indices = @transform_0, window_bounds = array<i64: 16, 32>}, {pipeline_mode = #tpu.pipeline_mode<synchronous>, transform_indices = @transform_1, window_bounds = array<i64: 32, 64>}, {pipeline_mode = #tpu.pipeline_mode<synchronous>, transform_indices = @transform_2, window_bounds = array<i64: 1, 64>}, {pipeline_mode = #tpu.pipeline_mode<synchronous>, transform_indices = @transform_3, window_bounds = array<i64: 64, 32>}, {pipeline_mode = #tpu.pipeline_mode<synchronous>, transform_indices = @transform_4, window_bounds = array<i64: 1, 32>}, {transform_indices = @transform_5, window_bounds = array<i64: 16, 32>}]} {
    %c0 = arith.constant 0 : index
    %c0_0 = arith.constant 0 : index
    %0 = vector.load %arg1[%c0, %c0_0] : memref<16x32xf32, #tpu.memory_space<vmem>>, vector<16x32xf32>
    %cst = arith.constant dense<0.000000e+00> : vector<16xf32>
    %1 = vector.multi_reduction <add>, %0, %cst [1] : vector<16x32xf32> to vector<16xf32>
    %2 = vector.shape_cast %1 : vector<16xf32> to vector<16x1xf32>
    %cst_1 = arith.constant 3.200000e+01 : f32
    %3 = vector.broadcast %cst_1 : f32 to vector<16x1xf32>
    %4 = arith.divf %2, %3 : vector<16x1xf32>
    %5 = vector.broadcast %4 : vector<16x1xf32> to vector<16x32xf32>
    %6 = arith.subf %0, %5 : vector<16x32xf32>
    %7 = arith.mulf %6, %6 : vector<16x32xf32>
    %cst_2 = arith.constant dense<0.000000e+00> : vector<16xf32>
    %8 = vector.multi_reduction <add>, %7, %cst_2 [1] : vector<16x32xf32> to vector<16xf32>
    %9 = vector.shape_cast %8 : vector<16xf32> to vector<16x1xf32>
    %cst_3 = arith.constant 3.200000e+01 : f32
    %10 = vector.broadcast %cst_3 : f32 to vector<16x1xf32>
    %11 = arith.divf %9, %10 : vector<16x1xf32>
    %12 = vector.broadcast %4 : vector<16x1xf32> to vector<16x32xf32>
    %13 = arith.subf %0, %12 : vector<16x32xf32>
    %cst_4 = arith.constant 9.99999974E-6 : f32
    %14 = vector.broadcast %cst_4 : f32 to vector<16x1xf32>
    %15 = arith.addf %11, %14 : vector<16x1xf32>
    %16 = math.rsqrt %15 : vector<16x1xf32>
    %17 = vector.broadcast %16 : vector<16x1xf32> to vector<16x32xf32>
    %18 = arith.mulf %13, %17 : vector<16x32xf32>
    %c0_5 = arith.constant 0 : index
    %c0_6 = arith.constant 0 : index
    %19 = vector.load %arg2[%c0_5, %c0_6] : memref<32x64xf32, #tpu.memory_space<vmem>>, vector<32x64xf32>
    %cst_7 = arith.constant dense<0.000000e+00> : vector<16x64xf32>
    %20 = tpu.matmul %18, %19, %cst_7 {dimension_numbers = #tpu.dot_dimension_numbers<[1], [0], [0], [1], [0, 0, 1, 1], [], []>} : vector<16x32xf32>, vector<32x64xf32>, vector<16x64xf32> -> vector<16x64xf32>
    %c0_8 = arith.constant 0 : index
    %c0_9 = arith.constant 0 : index
    %21 = vector.load %arg3[%c0_8, %c0_9] : memref<1x64xf32, #tpu.memory_space<vmem>>, vector<1x64xf32>
    %22 = vector.broadcast %21 : vector<1x64xf32> to vector<16x64xf32>
    %23 = arith.addf %20, %22 : vector<16x64xf32>
    %cst_10 = arith.constant 5.000000e-01 : f32
    %24 = vector.broadcast %cst_10 : f32 to vector<16x64xf32>
    %25 = arith.mulf %24, %23 : vector<16x64xf32>
    %cst_11 = arith.constant 0.707106769 : f32
    %26 = vector.broadcast %cst_11 : f32 to vector<16x64xf32>
    %27 = arith.mulf %23, %26 : vector<16x64xf32>
    %28 = math.erf %27 : vector<16x64xf32>
    %cst_12 = arith.constant 1.000000e+00 : f32
    %29 = vector.broadcast %cst_12 : f32 to vector<16x64xf32>
    %30 = arith.addf %29, %28 : vector<16x64xf32>
    %31 = arith.mulf %25, %30 : vector<16x64xf32>
    %c0_13 = arith.constant 0 : index
    %c0_14 = arith.constant 0 : index
    %32 = vector.load %arg4[%c0_13, %c0_14] : memref<64x32xf32, #tpu.memory_space<vmem>>, vector<64x32xf32>
    %cst_15 = arith.constant dense<0.000000e+00> : vector<16x32xf32>
    %33 = tpu.matmul %31, %32, %cst_15 {dimension_numbers = #tpu.dot_dimension_numbers<[1], [0], [0], [1], [0, 0, 1, 1], [], []>} : vector<16x64xf32>, vector<64x32xf32>, vector<16x32xf32> -> vector<16x32xf32>
    %c0_16 = arith.constant 0 : index
    %c0_17 = arith.constant 0 : index
    %34 = vector.load %arg5[%c0_16, %c0_17] : memref<1x32xf32, #tpu.memory_space<vmem>>, vector<1x32xf32>
    %35 = vector.broadcast %34 : vector<1x32xf32> to vector<16x32xf32>
    %36 = arith.addf %33, %35 : vector<16x32xf32>
    %37 = arith.addf %0, %36 : vector<16x32xf32>
    %c0_18 = arith.constant 0 : index
    %c0_19 = arith.constant 0 : index
    %38 = vector.load %arg6[%c0_18, %c0_19] : memref<16x32xf32, #tpu.memory_space<vmem>>, vector<16x32xf32>
    tpu.vector_store %arg6[%c0_18, %c0_19], %37 {strides = array<i32>} : memref<16x32xf32, #tpu.memory_space<vmem>>, vector<16x32xf32>,
    return
  }
  func.func @transform_0(%arg0: i32) -> (i32, i32) {
    %c0_i32 = arith.constant 0 : i32
    %c0_i32_0 = arith.constant 0 : i32
    return %arg0, %c0_i32 : i32, i32
  }
  func.func @transform_1(%arg0: i32) -> (i32, i32) {
    %c0_i32 = arith.constant 0 : i32
    %c0_i32_0 = arith.constant 0 : i32
    %c0_i32_1 = arith.constant 0 : i32
    return %c0_i32, %c0_i32_0 : i32, i32
  }
  func.func @transform_2(%arg0: i32) -> (i32, i32) {
    %c0_i32 = arith.constant 0 : i32
    %c0_i32_0 = arith.constant 0 : i32
    %c0_i32_1 = arith.constant 0 : i32
    return %c0_i32, %c0_i32_0 : i32, i32
  }
  func.func @transform_3(%arg0: i32) -> (i32, i32) {
    %c0_i32 = arith.constant 0 : i32
    %c0_i32_0 = arith.constant 0 : i32
    %c0_i32_1 = arith.constant 0 : i32
    return %c0_i32, %c0_i32_0 : i32, i32
  }
  func.func @transform_4(%arg0: i32) -> (i32, i32) {
    %c0_i32 = arith.constant 0 : i32
    %c0_i32_0 = arith.constant 0 : i32
    %c0_i32_1 = arith.constant 0 : i32
    return %c0_i32, %c0_i32_0 : i32, i32
  }
  func.func @transform_5(%arg0: i32) -> (i32, i32) {
    %c0_i32 = arith.constant 0 : i32
    %c0_i32_0 = arith.constant 0 : i32
    return %arg0, %c0_i32 : i32, i32
  }
}

</mosaic_0001>

<llo_original>
// kernel: transformer_forward_pallas.6
$region0: #{transformer_forward_pallas.6}
  #allocation0 [shape = 'u32[]', space=smem, size = 0x4, offset = 0x4, fixed_abs, tag = 'smem constant byte address 0x4 - core index']
  #allocation1 [shape = 'u32[144,128]{1,0:T(1,128)}', space=vmem, size = 0x12000, scoped, tag = 'internal scratch']
  %s0 = inlined_call_operand.hbm [shape: f32[16,16], index: 0, kind: input, shape index: {}]
  %s1 = inlined_call_operand.hbm [shape: f32[16,32], index: 1, kind: input, shape index: {}]
  %s2 = inlined_call_operand.hbm [shape: f32[1,32], index: 2, kind: input, shape index: {}]
  %s3 = inlined_call_operand.hbm [shape: f32[16,32], index: 3, kind: output, shape index: {}]
  %s4 = sld [smem:[#allocation0]]
  $region34: #{transformer_forward_pallas.6} parent=0
    _
  %s6 = ssub.s32 1, %s4
  %s7 = scalar_select 0, %s6, %s4
  $region1: #{transformer_forward_pallas.6} parent=0
    #allocation2 [shape = 'u8[8192]{0}', space=vmem, size = 0x2000, scoped, tag = 'input window, operand 0, single buffered']
    #allocation3 [shape = 's32[1]{0}', space=sflag, size = 0x4, scoped, tag = 'scoped memory for transformer_forward_pallas.6']
    #allocation4 [shape = 's32[1]{0}', space=sflag, size = 0x4, scoped, tag = 'scoped memory for transformer_forward_pallas.6']
    #allocation5 [shape = 'u8[8192]{0}', space=vmem, size = 0x2000, scoped, tag = 'input window, operand 1, single buffered']
    #allocation6 [shape = 's32[1]{0}', space=sflag, size = 0x4, scoped, tag = 'scoped memory for transformer_forward_pallas.6']
    #allocation7 [shape = 'u8[512]{0}', space=vmem, size = 0x400, scoped, tag = 'input window, operand 2, single buffered']
    #allocation8 [shape = 'u8[8192]{0}', space=vmem, size = 0x2000, scoped, tag = 'output window, operand 0, single buffered']
    %8 = vsyncpa [#allocation3], 0
    %9 = vsyncpa [#allocation6], 0
    %10 = vsyncpa [#allocation4], 0
    // Predicated region
    $region2: #{transformer_forward_pallas.6} parent=1 // pred_check
      _
    $region3: #{transformer_forward_pallas.6} parent=1 // pred_check_branch
      %12 = sbr.rel (0) target = $region5
    $region4: #{transformer_forward_pallas.6} parent=1 // pred_region
      %s14 = ssub.s32 256, 256
      %15 = vsyncadd [#allocation3], %s14
      %s16 = sshll.u32 [#allocation2], 4
      %s17 = int_to_ptr.vmem [resolvable:$true] %s16
      %22 = dma.hbm_to_vmem [thread:$0]  %s0, 256, %s17, [#allocation3], 128, 128, 8
    $region5: #{transformer_forward_pallas.6} parent=1 // pred_fallthru
      _
    // Predicated region
    $region6: #{transformer_forward_pallas.6} parent=1 // pred_check
      _
    $region7: #{transformer_forward_pallas.6} parent=1 // pred_check_branch
      %24 = sbr.rel (0) target = $region9
    $region8: #{transformer_forward_pallas.6} parent=1 // pred_region
      %s26 = ssub.s32 256, 256
      %27 = vsyncadd [#allocation6], %s26
      %s28 = sshll.u32 [#allocation5], 4
      %s29 = int_to_ptr.vmem [resolvable:$true] %s28
      %34 = dma.hbm_to_vmem [thread:$0]  %s1, 256, %s29, [#allocation6], 128, 128, 8
    $region9: #{transformer_forward_pallas.6} parent=1 // pred_fallthru
      _
    // Predicated region
    $region10: #{transformer_forward_pallas.6} parent=1 // pred_check
      _
    $region11: #{transformer_forward_pallas.6} parent=1 // pred_check_branch
      %36 = sbr.rel (0) target = $region13
    $region12: #{transformer_forward_pallas.6} parent=1 // pred_region
      %s38 = ssub.s32 16, 16
      %39 = vsyncadd [#allocation6], %s38
      %s41 = sshll.u32 [#allocation7], 4
      %s42 = int_to_ptr.vmem [resolvable:$true] %s41
      %44 = dma.hbm_to_vmem [thread:$0]  %s2, 16, %s42, [#allocation6]
    $region13: #{transformer_forward_pallas.6} parent=1 // pred_fallthru
      _
    // Predicated region
    $region14: #{transformer_forward_pallas.6} parent=1 // pred_check
      _
    $region15: #{transformer_forward_pallas.6} parent=1 // pred_check_branch
      %46 = sbr.rel (0) target = $region17
    $region16: #{transformer_forward_pallas.6} parent=1 // pred_region
      %47 = dma.done [#allocation3], 256
    $region17: #{transformer_forward_pallas.6} parent=1 // pred_fallthru
      _
    // Predicated region
    $region18: #{transformer_forward_pallas.6} parent=1 // pred_check
      _
    $region19: #{transformer_forward_pallas.6} parent=1 // pred_check_branch
      %49 = sbr.rel (0) target = $region21
    $region20: #{transformer_forward_pallas.6} parent=1 // pred_region
      %50 = dma.done [#allocation6], 256
    $region21: #{transformer_forward_pallas.6} parent=1 // pred_fallthru
      _
    // Predicated region
    $region22: #{transformer_forward_pallas.6} parent=1 // pred_check
      _
    $region23: #{transformer_forward_pallas.6} parent=1 // pred_check_branch
      %52 = sbr.rel (0) target = $region25
    $region24: #{transformer_forward_pallas.6} parent=1 // pred_region
      %53 = dma.done [#allocation6], 16
    $region25: #{transformer_forward_pallas.6} parent=1 // pred_fallthru
      _
    %v54 = vld [vmem:[#allocation2] sm:$0xff]
    %v55 = vld [vmem:[#allocation2 + $0x8] sm:$0xff]
    %v56 = vld [vmem:[#allocation5] sm:$0xff]
    %v57 = vld [vmem:[#allocation5 + $0x8] sm:$0xff]
    %v58 = vld [vmem:[#allocation7] sm:$0x1]
    %v60 = vlaneseq
    %v61 = vshrl.u32 %v60, 7
    %v62 = vsub.s32 0, %v61
    %v63 = vrot.slane %v58, %v62
    %vm65 = vcmask 130048
    %v67 = vsel %vm65, %v54, 0
    %v70 = vsel %vm65, %v55, 0
    %72 = vmatprep.subr.mxu0 0.0
    %73 = vmatpush1.msra.mxu0 %v56
    %74 = vmatprep.subr.mxu0 0.0
    %75 = vmatpush1.msra.mxu0 %v57
    %76 = vmatprep.subr.mxu0 0.0
    %77 = vmatpush1.msra.mxu0 0.0
    %78 = vmatprep.subr.mxu0 0.0
    %79 = vmatpush1.msra.mxu0 0.0
    %80 = vmatprep.subr.mxu0 0.0
    %81 = vmatpush1.msra.mxu0 0.0
    %82 = vmatprep.subr.mxu0 0.0
    %83 = vmatpush1.msra.mxu0 0.0
    %84 = vmatprep.subr.mxu0 0.0
    %85 = vmatpush1.msra.mxu0 0.0
    %86 = vmatprep.subr.mxu0 0.0
    %87 = vmatpush1.msra.mxu0 0.0
    %88 = vmatprep.subr.mxu0 0.0
    %89 = vmatpush1.msra.mxu0 0.0
    %90 = vmatprep.subr.mxu0 0.0
    %91 = vmatpush1.msra.mxu0 0.0
    %92 = vmatprep.subr.mxu0 0.0
    %93 = vmatpush1.msra.mxu0 0.0
    %94 = vmatprep.subr.mxu0 0.0
    %95 = vmatpush1.msra.mxu0 0.0
    %96 = vmatprep.subr.mxu0 0.0
    %97 = vmatpush1.msra.mxu0 0.0
    %98 = vmatprep.subr.mxu0 0.0
    %99 = vmatpush1.msra.mxu0 0.0
    %100 = vmatprep.subr.mxu0 0.0
    %101 = vmatpush1.msra.mxu0 0.0
    %102 = vmatprep.subr.mxu0 0.0
    %103 = vmatpush1.msra.mxu0 0.0
    %104 = vmatprep.subr.mxu0 0.0
    %105 = vmatpush1.msra.mxu0 0.0
    %106 = vmatprep.subr.mxu0 0.0
    %107 = vmatpush1.msra.mxu0 0.0
    %108 = vmatprep.subr.mxu0 0.0
    %109 = vmatpush1.msra.mxu0 0.0
    %110 = vmatprep.subr.mxu0 0.0
    %111 = vmatpush1.msra.mxu0 0.0
    %112 = vmatprep.subr.mxu0 0.0
    %113 = vmatpush1.msra.mxu0 0.0
    %114 = vmatprep.subr.mxu0 0.0
    %115 = vmatpush1.msra.mxu0 0.0
    %116 = vmatprep.subr.mxu0 0.0
    %117 = vmatpush1.msra.mxu0 0.0
    %118 = vmatprep.subr.mxu0 0.0
    %119 = vmatpush1.msra.mxu0 0.0
    %120 = vmatprep.subr.mxu0 0.0
    %121 = vmatpush1.msra.mxu0 0.0
    %122 = vmatprep.subr.mxu0 0.0
    %123 = vmatpush1.msra.mxu0 0.0
    %124 = vmatprep.subr.mxu0 0.0
    %125 = vmatpush1.msra.mxu0 0.0
    %126 = vmatprep.subr.mxu0 0.0
    %127 = vmatpush1.msra.mxu0 0.0
    %128 = vmatprep.subr.mxu0 0.0
    %129 = vmatpush1.msra.mxu0 0.0
    %130 = vmatprep.subr.mxu0 0.0
    %131 = vmatpush1.msra.mxu0 0.0
    %132 = vmatprep.subr.mxu0 0.0
    %133 = vmatpush1.msra.mxu0 0.0
    %134 = vmatprep.subr.mxu0 0.0
    %135 = vmatpush1.msra.mxu0 0.0
    %136 = vmatprep.mubr.f32.mxu0 0.0
    %137 = vmatmul.mubr.f32.gmra.mrb[0].mxu0 %v67
    %v138 = vpop.f32.mrb[0].mxu0
    %v139 = vadd.f32 %v63, %v138
    %v140 = vpop.f32.mrb[0].mxu0
    %141 = vmatprep.mubr.f32.mxu0 0.0
    %142 = vmatmul.mubr.f32.gmra.mrb[0].mxu0 %v70
    %v143 = vpop.f32.mrb[0].mxu0
    %v144 = vadd.f32 %v63, %v143
    %v145 = vpop.f32.mrb[0].mxu0
    %146 = vdwg.mxu0
    %vm147 = vcmask 261120
    %148 = vst.msk [vmem:[#allocation8] sm:$0xff] %vm147, %v139
    %149 = vst.msk [vmem:[#allocation8 + $0x8] sm:$0xff] %vm147, %v144
    // Predicated region
    $region26: #{transformer_forward_pallas.6} parent=1 // pred_check
      _
    $region27: #{transformer_forward_pallas.6} parent=1 // pred_check_branch
      %151 = sbr.rel (0) target = $region29
    $region28: #{transformer_forward_pallas.6} parent=1 // pred_region
      %s153 = ssub.s32 256, 256
      %154 = vsyncadd [#allocation4], %s153
      %s155 = sshll.u32 [#allocation8], 4
      %s156 = int_to_ptr.vmem [resolvable:$true] %s155
      %161 = dma.vmem_to_hbm [thread:$0]  %s156, 256, %s3, [#allocation4], 128, 128, 8
    $region29: #{transformer_forward_pallas.6} parent=1 // pred_fallthru
      _
    // Predicated region
    $region30: #{transformer_forward_pallas.6} parent=1 // pred_check
      _
    $region31: #{transformer_forward_pallas.6} parent=1 // pred_check_branch
      %163 = sbr.rel (0) target = $region33
    $region32: #{transformer_forward_pallas.6} parent=1 // pred_region
      %164 = dma.done [#allocation4], 256
    $region33: #{transformer_forward_pallas.6} parent=1 // pred_fallthru
      _
    %165 = vsyncpa [#allocation3], 1
    %166 = vsyncpa [#allocation6], 1
    %167 = vsyncpa [#allocation4], 1

// kernel: transformer_forward_pallas.8
$region0: #{transformer_forward_pallas.8}
  #allocation0 [shape = 'u32[]', space=smem, size = 0x4, offset = 0x4, fixed_abs, tag = 'smem constant byte address 0x4 - core index']
  #allocation1 [shape = 'u32[144,128]{1,0:T(1,128)}', space=vmem, size = 0x12000, scoped, tag = 'internal scratch']
  %s0 = inlined_call_operand.hbm [shape: f32[16,32], index: 0, kind: input, shape index: {}]
  %s1 = inlined_call_operand.hbm [shape: f32[32,64], index: 1, kind: input, shape index: {}]
  %s2 = inlined_call_operand.hbm [shape: f32[1,64], index: 2, kind: input, shape index: {}]
  %s3 = inlined_call_operand.hbm [shape: f32[64,32], index: 3, kind: input, shape index: {}]
  %s4 = inlined_call_operand.hbm [shape: f32[1,32], index: 4, kind: input, shape index: {}]
  %s5 = inlined_call_operand.hbm [shape: f32[16,32], index: 5, kind: output, shape index: {}]
  %s6 = sld [smem:[#allocation0]]
  $region50: #{transformer_forward_pallas.8} parent=0
    _
  %s8 = ssub.s32 1, %s6
  %s9 = scalar_select 0, %s8, %s6
  $region1: #{transformer_forward_pallas.8} parent=0
    #allocation2 [shape = 'u8[8192]{0}', space=vmem, size = 0x2000, scoped, tag = 'input window, operand 0, single buffered']
    #allocation3 [shape = 's32[1]{0}', space=sflag, size = 0x4, scoped, tag = 'scoped memory for transformer_forward_pallas.8']
    #allocation4 [shape = 's32[1]{0}', space=sflag, size = 0x4, scoped, tag = 'scoped memory for transformer_forward_pallas.8']
    #allocation5 [shape = 'u8[16384]{0}', space=vmem, size = 0x4000, scoped, tag = 'input window, operand 1, single buffered']
    #allocation6 [shape = 's32[1]{0}', space=sflag, size = 0x4, scoped, tag = 'scoped memory for transformer_forward_pallas.8']
    #allocation7 [shape = 'u8[512]{0}', space=vmem, size = 0x400, scoped, tag = 'input window, operand 2, single buffered']
    #allocation8 [shape = 'u8[32768]{0}', space=vmem, size = 0x8000, scoped, tag = 'input window, operand 3, single buffered']
    #allocation9 [shape = 's32[1]{0}', space=sflag, size = 0x4, scoped, tag = 'scoped memory for transformer_forward_pallas.8']
    #allocation10 [shape = 'u8[512]{0}', space=vmem, size = 0x400, scoped, tag = 'input window, operand 4, single buffered']
    #allocation11 [shape = 'u8[8192]{0}', space=vmem, size = 0x2000, scoped, tag = 'output window, operand 0, single buffered']
    %10 = vsyncpa [#allocation3], 0
    %11 = vsyncpa [#allocation6], 0
    %12 = vsyncpa [#allocation9], 0
    %13 = vsyncpa [#allocation4], 0
    // Predicated region
    $region2: #{transformer_forward_pallas.8} parent=1 // pred_check
      _
    $region3: #{transformer_forward_pallas.8} parent=1 // pred_check_branch
      %15 = sbr.rel (0) target = $region5
    $region4: #{transformer_forward_pallas.8} parent=1 // pred_region
      %s17 = ssub.s32 256, 256
      %18 = vsyncadd [#allocation3], %s17
      %s19 = sshll.u32 [#allocation2], 4
      %s20 = int_to_ptr.vmem [resolvable:$true] %s19
      %25 = dma.hbm_to_vmem [thread:$0]  %s0, 256, %s20, [#allocation3], 128, 128, 8
    $region5: #{transformer_forward_pallas.8} parent=1 // pred_fallthru
      _
    // Predicated region
    $region6: #{transformer_forward_pallas.8} parent=1 // pred_check
      _
    $region7: #{transformer_forward_pallas.8} parent=1 // pred_check_branch
      %27 = sbr.rel (0) target = $region9
    $region8: #{transformer_forward_pallas.8} parent=1 // pred_region
      %s29 = ssub.s32 512, 512
      %30 = vsyncadd [#allocation6], %s29
      %s31 = sshll.u32 [#allocation5], 4
      %s32 = int_to_ptr.vmem [resolvable:$true] %s31
      %37 = dma.hbm_to_vmem [thread:$0]  %s1, 512, %s32, [#allocation6], 128, 128, 8
    $region9: #{transformer_forward_pallas.8} parent=1 // pred_fallthru
      _
    // Predicated region
    $region10: #{transformer_forward_pallas.8} parent=1 // pred_check
      _
    $region11: #{transformer_forward_pallas.8} parent=1 // pred_check_branch
      %39 = sbr.rel (0) target = $region13
    $region12: #{transformer_forward_pallas.8} parent=1 // pred_region
      %s41 = ssub.s32 16, 16
      %42 = vsyncadd [#allocation6], %s41
      %s44 = sshll.u32 [#allocation7], 4
      %s45 = int_to_ptr.vmem [resolvable:$true] %s44
      %47 = dma.hbm_to_vmem [thread:$0]  %s2, 16, %s45, [#allocation6]
    $region13: #{transformer_forward_pallas.8} parent=1 // pred_fallthru
      _
    // Predicated region
    $region14: #{transformer_forward_pallas.8} parent=1 // pred_check
      _
    $region15: #{transformer_forward_pallas.8} parent=1 // pred_check_branch
      %49 = sbr.rel (0) target = $region17
    $region16: #{transformer_forward_pallas.8} parent=1 // pred_region
      %s51 = ssub.s32 1024, 1024
      %52 = vsyncadd [#allocation9], %s51
      %s53 = sshll.u32 [#allocation8], 4
      %s54 = int_to_ptr.vmem [resolvable:$true] %s53
      %59 = dma.hbm_to_vmem [thread:$0]  %s3, 1024, %s54, [#allocation9], 128, 128, 8
    $region17: #{transformer_forward_pallas.8} parent=1 // pred_fallthru
      _
    // Predicated region
    $region18: #{transformer_forward_pallas.8} parent=1 // pred_check
      _
    $region19: #{transformer_forward_pallas.8} parent=1 // pred_check_branch
      %61 = sbr.rel (0) target = $region21
    $region20: #{transformer_forward_pallas.8} parent=1 // pred_region
      %s63 = ssub.s32 16, 16
      %64 = vsyncadd [#allocation9], %s63
      %s66 = sshll.u32 [#allocation10], 4
      %s67 = int_to_ptr.vmem [resolvable:$true] %s66
      %69 = dma.hbm_to_vmem [thread:$0]  %s4, 16, %s67, [#allocation9]
    $region21: #{transformer_forward_pallas.8} parent=1 // pred_fallthru
      _
    // Predicated region
    $region22: #{transformer_forward_pallas.8} parent=1 // pred_check
      _
    $region23: #{transformer_forward_pallas.8} parent=1 // pred_check_branch
      %71 = sbr.rel (0) target = $region25
    $region24: #{transformer_forward_pallas.8} parent=1 // pred_region
      %72 = dma.done [#allocation3], 256
    $region25: #{transformer_forward_pallas.8} parent=1 // pred_fallthru
      _
    // Predicated region
    $region26: #{transformer_forward_pallas.8} parent=1 // pred_check
      _
    $region27: #{transformer_forward_pallas.8} parent=1 // pred_check_branch
      %74 = sbr.rel (0) target = $region29
    $region28: #{transformer_forward_pallas.8} parent=1 // pred_region
      %75 = dma.done [#allocation6], 512
    $region29: #{transformer_forward_pallas.8} parent=1 // pred_fallthru
      _
    // Predicated region
    $region30: #{transformer_forward_pallas.8} parent=1 // pred_check
      _
    $region31: #{transformer_forward_pallas.8} parent=1 // pred_check_branch
      %77 = sbr.rel (0) target = $region33
    $region32: #{transformer_forward_pallas.8} parent=1 // pred_region
      %78 = dma.done [#allocation6], 16
    $region33: #{transformer_forward_pallas.8} parent=1 // pred_fallthru
      _
    // Predicated region
    $region34: #{transformer_forward_pallas.8} parent=1 // pred_check
      _
    $region35: #{transformer_forward_pallas.8} parent=1 // pred_check_branch
      %80 = sbr.rel (0) target = $region37
    $region36: #{transformer_forward_pallas.8} parent=1 // pred_region
      %81 = dma.done [#allocation9], 1024
    $region37: #{transformer_forward_pallas.8} parent=1 // pred_fallthru
      _
    // Predicated region
    $region38: #{transformer_forward_pallas.8} parent=1 // pred_check
      _
    $region39: #{transformer_forward_pallas.8} parent=1 // pred_check_branch
      %83 = sbr.rel (0) target = $region41
    $region40: #{transformer_forward_pallas.8} parent=1 // pred_region
      %84 = dma.done [#allocation9], 16
    $region41: #{transformer_forward_pallas.8} parent=1 // pred_fallthru
      _
    %v85 = vld [vmem:[#allocation2] sm:$0xff]
    %v86 = vld [vmem:[#allocation2 + $0x8] sm:$0xff]
    %vm87 = vcmask 261120
    %v88 = vsel %vm87, %v85, 0.0
    %89 = vadd.xlane.f32.xlu0 %v88
    %v90 = vpop.xlane.xlu0 %89
    %v91 = vsel %vm87, %v86, 0.0
    %92 = vadd.xlane.f32.xlu0 %v91
    %v93 = vpop.xlane.xlu0 %92
    %v94 = vrcp.pop 32.0
    %v95 = vmul.f32 %v90, %v94
    %v96 = vmul.f32 %v93, %v94
    %v97 = vsub.f32 %v85, %v95
    %v98 = vsub.f32 %v86, %v96
    %v99 = vmul.f32 %v97, %v97
    %v100 = vmul.f32 %v98, %v98
    %v101 = vsel %vm87, %v99, 0.0
    %102 = vadd.xlane.f32.xlu0 %v101
    %v103 = vpop.xlane.xlu0 %102
    %v104 = vsel %vm87, %v100, 0.0
    %105 = vadd.xlane.f32.xlu0 %v104
    %v106 = vpop.xlane.xlu0 %105
    %v107 = vmul.f32 %v103, %v94
    %v108 = vmul.f32 %v106, %v94
    %v109 = vadd.f32 %v107, 1e-05
    %v110 = vadd.f32 %v108, 1e-05
    %v111 = vrsqrt.pop %v109
    %v112 = vrsqrt.pop %v110
    %v113 = vmul.f32 %v97, %v111
    %v114 = vmul.f32 %v98, %v112
    %v115 = vld [vmem:[#allocation5] sm:$0xff]
    %v116 = vld [vmem:[#allocation5 + $0x8] sm:$0xff]
    %v117 = vld [vmem:[#allocation5 + $0x10] sm:$0xff]
    %v118 = vld [vmem:[#allocation5 + $0x18] sm:$0xff]
    %v119 = vld [vmem:[#allocation7] sm:$0x1]
    %v121 = vlaneseq
    %v122 = vshrl.u32 %v121, 7
    %v123 = vsub.s32 0, %v122
    %v124 = vrot.slane %v119, %v123
    %v127 = vsel %vm87, %v113, 0
    %v130 = vsel %vm87, %v114, 0
    %132 = vmatprep.subr.mxu0 0.0
    %133 = vmatpush1.msra.mxu0 %v115
    %134 = vmatprep.subr.mxu0 0.0
    %135 = vmatpush1.msra.mxu0 %v116
    %136 = vmatprep.subr.mxu0 0.0
    %137 = vmatpush1.msra.mxu0 %v117
    %138 = vmatprep.subr.mxu0 0.0
    %139 = vmatpush1.msra.mxu0 %v118
    %140 = vmatprep.subr.mxu0 0.0
    %141 = vmatpush1.msra.mxu0 0.0
    %142 = vmatprep.subr.mxu0 0.0
    %143 = vmatpush1.msra.mxu0 0.0
    %144 = vmatprep.subr.mxu0 0.0
    %145 = vmatpush1.msra.mxu0 0.0
    %146 = vmatprep.subr.mxu0 0.0
    %147 = vmatpush1.msra.mxu0 0.0
    %148 = vmatprep.subr.mxu0 0.0
    %149 = vmatpush1.msra.mxu0 0.0
    %150 = vmatprep.subr.mxu0 0.0
    %151 = vmatpush1.msra.mxu0 0.0
    %152 = vmatprep.subr.mxu0 0.0
    %153 = vmatpush1.msra.mxu0 0.0
    %154 = vmatprep.subr.mxu0 0.0
    %155 = vmatpush1.msra.mxu0 0.0
    %156 = vmatprep.subr.mxu0 0.0
    %157 = vmatpush1.msra.mxu0 0.0
    %158 = vmatprep.subr.mxu0 0.0
    %159 = vmatpush1.msra.mxu0 0.0
    %160 = vmatprep.subr.mxu0 0.0
    %161 = vmatpush1.msra.mxu0 0.0
    %162 = vmatprep.subr.mxu0 0.0
    %163 = vmatpush1.msra.mxu0 0.0
    %164 = vmatprep.subr.mxu0 0.0
    %165 = vmatpush1.msra.mxu0 0.0
    %166 = vmatprep.subr.mxu0 0.0
    %167 = vmatpush1.msra.mxu0 0.0
    %168 = vmatprep.subr.mxu0 0.0
    %169 = vmatpush1.msra.mxu0 0.0
    %170 = vmatprep.subr.mxu0 0.0
    %171 = vmatpush1.msra.mxu0 0.0
    %172 = vmatprep.subr.mxu0 0.0
    %173 = vmatpush1.msra.mxu0 0.0
    %174 = vmatprep.subr.mxu0 0.0
    %175 = vmatpush1.msra.mxu0 0.0
    %176 = vmatprep.subr.mxu0 0.0
    %177 = vmatpush1.msra.mxu0 0.0
    %178 = vmatprep.subr.mxu0 0.0
    %179 = vmatpush1.msra.mxu0 0.0
    %180 = vmatprep.subr.mxu0 0.0
    %181 = vmatpush1.msra.mxu0 0.0
    %182 = vmatprep.subr.mxu0 0.0
    %183 = vmatpush1.msra.mxu0 0.0
    %184 = vmatprep.subr.mxu0 0.0
    %185 = vmatpush1.msra.mxu0 0.0
    %186 = vmatprep.subr.mxu0 0.0
    %187 = vmatpush1.msra.mxu0 0.0
    %188 = vmatprep.subr.mxu0 0.0
    %189 = vmatpush1.msra.mxu0 0.0
    %190 = vmatprep.subr.mxu0 0.0
    %191 = vmatpush1.msra.mxu0 0.0
    %192 = vmatprep.subr.mxu0 0.0
    %193 = vmatpush1.msra.mxu0 0.0
    %194 = vmatprep.subr.mxu0 0.0
    %195 = vmatpush1.msra.mxu0 0.0
    %196 = vmatprep.mubr.f32.mxu0 0.0
    %197 = vmatmul.mubr.f32.gmra.mrb[0].mxu0 %v127
    %v198 = vpop.f32.mrb[0].mxu0
    %v199 = vadd.f32 %v124, %v198
    %v200 = vpop.f32.mrb[0].mxu0
    %201 = vmatprep.mubr.f32.mxu0 0.0
    %202 = vmatmul.mubr.f32.gmra.mrb[0].mxu0 %v130
    %v203 = vpop.f32.mrb[0].mxu0
    %v204 = vadd.f32 %v124, %v203
    %v205 = vpop.f32.mrb[0].mxu0
    %206 = vdwg.mxu0
    %v207 = vmul.f32 %v199, 0.5
    %v208 = vmul.f32 %v204, 0.5
    %v209 = vmul.f32 %v199, 0.70710677
    %v210 = vmul.f32 %v204, 0.70710677
    %v211 = verf.f32.pop %v209
    %v212 = verf.f32.pop %v210
    %v213 = vadd.f32 %v211, 1.0
    %v214 = vadd.f32 %v212, 1.0
    %v215 = vmul.f32 %v207, %v213
    %v216 = vmul.f32 %v208, %v214
    %v217 = vld [vmem:[#allocation8] sm:$0xff]
    %v218 = vld [vmem:[#allocation8 + $0x8] sm:$0xff]
    %v219 = vld [vmem:[#allocation8 + $0x10] sm:$0xff]
    %v220 = vld [vmem:[#allocation8 + $0x18] sm:$0xff]
    %v221 = vld [vmem:[#allocation8 + $0x20] sm:$0xff]
    %v222 = vld [vmem:[#allocation8 + $0x28] sm:$0xff]
    %v223 = vld [vmem:[#allocation8 + $0x30] sm:$0xff]
    %v224 = vld [vmem:[#allocation8 + $0x38] sm:$0xff]
    %v225 = vld [vmem:[#allocation10] sm:$0x1]
    %v227 = vlaneseq
    %v228 = vshrl.u32 %v227, 7
    %v229 = vsub.s32 0, %v228
    %v230 = vrot.slane %v225, %v229
    %vm232 = vcmask 523264
    %v234 = vsel %vm232, %v215, 0
    %v237 = vsel %vm232, %v216, 0
    %239 = vmatprep.subr.mxu0 0.0
    %240 = vmatpush1.msra.mxu0 %v217
    %241 = vmatprep.subr.mxu0 0.0
    %242 = vmatpush1.msra.mxu0 %v218
    %243 = vmatprep.subr.mxu0 0.0
    %244 = vmatpush1.msra.mxu0 %v219
    %245 = vmatprep.subr.mxu0 0.0
    %246 = vmatpush1.msra.mxu0 %v220
    %247 = vmatprep.subr.mxu0 0.0
    %248 = vmatpush1.msra.mxu0 %v221
    %249 = vmatprep.subr.mxu0 0.0
    %250 = vmatpush1.msra.mxu0 %v222
    %251 = vmatprep.subr.mxu0 0.0
    %252 = vmatpush1.msra.mxu0 %v223
    %253 = vmatprep.subr.mxu0 0.0
    %254 = vmatpush1.msra.mxu0 %v224
    %255 = vmatprep.subr.mxu0 0.0
    %256 = vmatpush1.msra.mxu0 0.0
    %257 = vmatprep.subr.mxu0 0.0
    %258 = vmatpush1.msra.mxu0 0.0
    %259 = vmatprep.subr.mxu0 0.0
    %260 = vmatpush1.msra.mxu0 0.0
    %261 = vmatprep.subr.mxu0 0.0
    %262 = vmatpush1.msra.mxu0 0.0
    %263 = vmatprep.subr.mxu0 0.0
    %264 = vmatpush1.msra.mxu0 0.0
    %265 = vmatprep.subr.mxu0 0.0
    %266 = vmatpush1.msra.mxu0 0.0
    %267 = vmatprep.subr.mxu0 0.0
    %268 = vmatpush1.msra.mxu0 0.0
    %269 = vmatprep.subr.mxu0 0.0
    %270 = vmatpush1.msra.mxu0 0.0
    %271 = vmatprep.subr.mxu0 0.0
    %272 = vmatpush1.msra.mxu0 0.0
    %273 = vmatprep.subr.mxu0 0.0
    %274 = vmatpush1.msra.mxu0 0.0
    %275 = vmatprep.subr.mxu0 0.0
    %276 = vmatpush1.msra.mxu0 0.0
    %277 = vmatprep.subr.mxu0 0.0
    %278 = vmatpush1.msra.mxu0 0.0
    %279 = vmatprep.subr.mxu0 0.0
    %280 = vmatpush1.msra.mxu0 0.0
    %281 = vmatprep.subr.mxu0 0.0
    %282 = vmatpush1.msra.mxu0 0.0
    %283 = vmatprep.subr.mxu0 0.0
    %284 = vmatpush1.msra.mxu0 0.0
    %285 = vmatprep.subr.mxu0 0.0
    %286 = vmatpush1.msra.mxu0 0.0
    %287 = vmatprep.subr.mxu0 0.0
    %288 = vmatpush1.msra.mxu0 0.0
    %289 = vmatprep.subr.mxu0 0.0
    %290 = vmatpush1.msra.mxu0 0.0
    %291 = vmatprep.subr.mxu0 0.0
    %292 = vmatpush1.msra.mxu0 0.0
    %293 = vmatprep.subr.mxu0 0.0
    %294 = vmatpush1.msra.mxu0 0.0
    %295 = vmatprep.subr.mxu0 0.0
    %296 = vmatpush1.msra.mxu0 0.0
    %297 = vmatprep.subr.mxu0 0.0
    %298 = vmatpush1.msra.mxu0 0.0
    %299 = vmatprep.subr.mxu0 0.0
    %300 = vmatpush1.msra.mxu0 0.0
    %301 = vmatprep.subr.mxu0 0.0
    %302 = vmatpush1.msra.mxu0 0.0
    %303 = vmatprep.mubr.f32.mxu0 0.0
    %304 = vmatmul.mubr.f32.gmra.mrb[0].mxu0 %v234
    %v305 = vpop.f32.mrb[0].mxu0
    %v306 = vadd.f32 %v230, %v305
    %v307 = vpop.f32.mrb[0].mxu0
    %308 = vmatprep.mubr.f32.mxu0 0.0
    %309 = vmatmul.mubr.f32.gmra.mrb[0].mxu0 %v237
    %v310 = vpop.f32.mrb[0].mxu0
    %v311 = vadd.f32 %v230, %v310
    %v312 = vpop.f32.mrb[0].mxu0
    %313 = vdwg.mxu0
    %v314 = vadd.f32 %v85, %v306
    %v315 = vadd.f32 %v86, %v311
    %316 = vst.msk [vmem:[#allocation11] sm:$0xff] %vm87, %v314
    %317 = vst.msk [vmem:[#allocation11 + $0x8] sm:$0xff] %vm87, %v315
    // Predicated region
    $region42: #{transformer_forward_pallas.8} parent=1 // pred_check
      _
    $region43: #{transformer_forward_pallas.8} parent=1 // pred_check_branch
      %319 = sbr.rel (0) target = $region45
    $region44: #{transformer_forward_pallas.8} parent=1 // pred_region
      %s321 = ssub.s32 256, 256
      %322 = vsyncadd [#allocation4], %s321
      %s323 = sshll.u32 [#allocation11], 4
      %s324 = int_to_ptr.vmem [resolvable:$true] %s323
      %329 = dma.vmem_to_hbm [thread:$0]  %s324, 256, %s5, [#allocation4], 128, 128, 8
    $region45: #{transformer_forward_pallas.8} parent=1 // pred_fallthru
      _
    // Predicated region
    $region46: #{transformer_forward_pallas.8} parent=1 // pred_check
      _
    $region47: #{transformer_forward_pallas.8} parent=1 // pred_check_branch
      %331 = sbr.rel (0) target = $region49
    $region48: #{transformer_forward_pallas.8} parent=1 // pred_region
      %332 = dma.done [#allocation4], 256
    $region49: #{transformer_forward_pallas.8} parent=1 // pred_fallthru
      _
    %333 = vsyncpa [#allocation3], 1
    %334 = vsyncpa [#allocation6], 1
    %335 = vsyncpa [#allocation9], 1
    %336 = vsyncpa [#allocation4], 1

// kernel: transformer_forward_pallas.11
$region0: #{transformer_forward_pallas.11}
  #allocation0 [shape = 'u32[]', space=smem, size = 0x4, offset = 0x4, fixed_abs, tag = 'smem constant byte address 0x4 - core index']
  #allocation1 [shape = 'u32[144,128]{1,0:T(1,128)}', space=vmem, size = 0x12000, scoped, tag = 'internal scratch']
  %s0 = inlined_call_operand.hbm [shape: f32[16,32], index: 0, kind: input, shape index: {}]
  %s1 = inlined_call_operand.hbm [shape: f32[32,8], index: 1, kind: input, shape index: {}]
  %s2 = inlined_call_operand.hbm [shape: f32[1,8], index: 2, kind: input, shape index: {}]
  %s3 = inlined_call_operand.hbm [shape: f32[16,8], index: 3, kind: output, shape index: {}]
  %s4 = sld [smem:[#allocation0]]
  $region34: #{transformer_forward_pallas.11} parent=0
    _
  %s6 = ssub.s32 1, %s4
  %s7 = scalar_select 0, %s6, %s4
  $region1: #{transformer_forward_pallas.11} parent=0
    #allocation2 [shape = 'u8[8192]{0}', space=vmem, size = 0x2000, scoped, tag = 'input window, operand 0, single buffered']
    #allocation3 [shape = 's32[1]{0}', space=sflag, size = 0x4, scoped, tag = 'scoped memory for transformer_forward_pallas.11']
    #allocation4 [shape = 's32[1]{0}', space=sflag, size = 0x4, scoped, tag = 'scoped memory for transformer_forward_pallas.11']
    #allocation5 [shape = 'u8[16384]{0}', space=vmem, size = 0x4000, scoped, tag = 'input window, operand 1, single buffered']
    #allocation6 [shape = 's32[1]{0}', space=sflag, size = 0x4, scoped, tag = 'scoped memory for transformer_forward_pallas.11']
    #allocation7 [shape = 'u8[512]{0}', space=vmem, size = 0x400, scoped, tag = 'input window, operand 2, single buffered']
    #allocation8 [shape = 'u8[8192]{0}', space=vmem, size = 0x2000, scoped, tag = 'output window, operand 0, single buffered']
    %8 = vsyncpa [#allocation3], 0
    %9 = vsyncpa [#allocation6], 0
    %10 = vsyncpa [#allocation4], 0
    // Predicated region
    $region2: #{transformer_forward_pallas.11} parent=1 // pred_check
      _
    $region3: #{transformer_forward_pallas.11} parent=1 // pred_check_branch
      %12 = sbr.rel (0) target = $region5
    $region4: #{transformer_forward_pallas.11} parent=1 // pred_region
      %s14 = ssub.s32 256, 256
      %15 = vsyncadd [#allocation3], %s14
      %s16 = sshll.u32 [#allocation2], 4
      %s17 = int_to_ptr.vmem [resolvable:$true] %s16
      %22 = dma.hbm_to_vmem [thread:$0]  %s0, 256, %s17, [#allocation3], 128, 128, 8
    $region5: #{transformer_forward_pallas.11} parent=1 // pred_fallthru
      _
    // Predicated region
    $region6: #{transformer_forward_pallas.11} parent=1 // pred_check
      _
    $region7: #{transformer_forward_pallas.11} parent=1 // pred_check_branch
      %24 = sbr.rel (0) target = $region9
    $region8: #{transformer_forward_pallas.11} parent=1 // pred_region
      %s26 = ssub.s32 512, 512
      %27 = vsyncadd [#allocation6], %s26
      %s28 = sshll.u32 [#allocation5], 4
      %s29 = int_to_ptr.vmem [resolvable:$true] %s28
      %34 = dma.hbm_to_vmem [thread:$0]  %s1, 512, %s29, [#allocation6], 128, 128, 8
    $region9: #{transformer_forward_pallas.11} parent=1 // pred_fallthru
      _
    // Predicated region
    $region10: #{transformer_forward_pallas.11} parent=1 // pred_check
      _
    $region11: #{transformer_forward_pallas.11} parent=1 // pred_check_branch
      %36 = sbr.rel (0) target = $region13
    $region12: #{transformer_forward_pallas.11} parent=1 // pred_region
      %s38 = ssub.s32 16, 16
      %39 = vsyncadd [#allocation6], %s38
      %s41 = sshll.u32 [#allocation7], 4
      %s42 = int_to_ptr.vmem [resolvable:$true] %s41
      %44 = dma.hbm_to_vmem [thread:$0]  %s2, 16, %s42, [#allocation6]
    $region13: #{transformer_forward_pallas.11} parent=1 // pred_fallthru
      _
    // Predicated region
    $region14: #{transformer_forward_pallas.11} parent=1 // pred_check
      _
    $region15: #{transformer_forward_pallas.11} parent=1 // pred_check_branch
      %46 = sbr.rel (0) target = $region17
    $region16: #{transformer_forward_pallas.11} parent=1 // pred_region
      %47 = dma.done [#allocation3], 256
    $region17: #{transformer_forward_pallas.11} parent=1 // pred_fallthru
      _
    // Predicated region
    $region18: #{transformer_forward_pallas.11} parent=1 // pred_check
      _
    $region19: #{transformer_forward_pallas.11} parent=1 // pred_check_branch
      %49 = sbr.rel (0) target = $region21
    $region20: #{transformer_forward_pallas.11} parent=1 // pred_region
      %50 = dma.done [#allocation6], 512
    $region21: #{transformer_forward_pallas.11} parent=1 // pred_fallthru
      _
    // Predicated region
    $region22: #{transformer_forward_pallas.11} parent=1 // pred_check
      _
    $region23: #{transformer_forward_pallas.11} parent=1 // pred_check_branch
      %52 = sbr.rel (0) target = $region25
    $region24: #{transformer_forward_pallas.11} parent=1 // pred_region
      %53 = dma.done [#allocation6], 16
    $region25: #{transformer_forward_pallas.11} parent=1 // pred_fallthru
      _
    %v54 = vld [vmem:[#allocation2] sm:$0xff]
    %v55 = vld [vmem:[#allocation2 + $0x8] sm:$0xff]
    %v56 = vld [vmem:[#allocation5] sm:$0xff]
    %v57 = vld [vmem:[#allocation5 + $0x8] sm:$0xff]
    %v58 = vld [vmem:[#allocation5 + $0x10] sm:$0xff]
    %v59 = vld [vmem:[#allocation5 + $0x18] sm:$0xff]
    %v60 = vld [vmem:[#allocation7] sm:$0x1]
    %v62 = vlaneseq
    %v63 = vshrl.u32 %v62, 7
    %v64 = vsub.s32 0, %v63
    %v65 = vrot.slane %v60, %v64
    %vm67 = vcmask 261120
    %v69 = vsel %vm67, %v54, 0
    %v72 = vsel %vm67, %v55, 0
    %74 = vmatprep.subr.mxu0 0.0
    %75 = vmatpush1.msra.mxu0 %v56
    %76 = vmatprep.subr.mxu0 0.0
    %77 = vmatpush1.msra.mxu0 %v57
    %78 = vmatprep.subr.mxu0 0.0
    %79 = vmatpush1.msra.mxu0 %v58
    %80 = vmatprep.subr.mxu0 0.0
    %81 = vmatpush1.msra.mxu0 %v59
    %82 = vmatprep.subr.mxu0 0.0
    %83 = vmatpush1.msra.mxu0 0.0
    %84 = vmatprep.subr.mxu0 0.0
    %85 = vmatpush1.msra.mxu0 0.0
    %86 = vmatprep.subr.mxu0 0.0
    %87 = vmatpush1.msra.mxu0 0.0
    %88 = vmatprep.subr.mxu0 0.0
    %89 = vmatpush1.msra.mxu0 0.0
    %90 = vmatprep.subr.mxu0 0.0
    %91 = vmatpush1.msra.mxu0 0.0
    %92 = vmatprep.subr.mxu0 0.0
    %93 = vmatpush1.msra.mxu0 0.0
    %94 = vmatprep.subr.mxu0 0.0
    %95 = vmatpush1.msra.mxu0 0.0
    %96 = vmatprep.subr.mxu0 0.0
    %97 = vmatpush1.msra.mxu0 0.0
    %98 = vmatprep.subr.mxu0 0.0
    %99 = vmatpush1.msra.mxu0 0.0
    %100 = vmatprep.subr.mxu0 0.0
    %101 = vmatpush1.msra.mxu0 0.0
    %102 = vmatprep.subr.mxu0 0.0
    %103 = vmatpush1.msra.mxu0 0.0
    %104 = vmatprep.subr.mxu0 0.0
    %105 = vmatpush1.msra.mxu0 0.0
    %106 = vmatprep.subr.mxu0 0.0
    %107 = vmatpush1.msra.mxu0 0.0
    %108 = vmatprep.subr.mxu0 0.0
    %109 = vmatpush1.msra.mxu0 0.0
    %110 = vmatprep.subr.mxu0 0.0
    %111 = vmatpush1.msra.mxu0 0.0
    %112 = vmatprep.subr.mxu0 0.0
    %113 = vmatpush1.msra.mxu0 0.0
    %114 = vmatprep.subr.mxu0 0.0
    %115 = vmatpush1.msra.mxu0 0.0
    %116 = vmatprep.subr.mxu0 0.0
    %117 = vmatpush1.msra.mxu0 0.0
    %118 = vmatprep.subr.mxu0 0.0
    %119 = vmatpush1.msra.mxu0 0.0
    %120 = vmatprep.subr.mxu0 0.0
    %121 = vmatpush1.msra.mxu0 0.0
    %122 = vmatprep.subr.mxu0 0.0
    %123 = vmatpush1.msra.mxu0 0.0
    %124 = vmatprep.subr.mxu0 0.0
    %125 = vmatpush1.msra.mxu0 0.0
    %126 = vmatprep.subr.mxu0 0.0
    %127 = vmatpush1.msra.mxu0 0.0
    %128 = vmatprep.subr.mxu0 0.0
    %129 = vmatpush1.msra.mxu0 0.0
    %130 = vmatprep.subr.mxu0 0.0
    %131 = vmatpush1.msra.mxu0 0.0
    %132 = vmatprep.subr.mxu0 0.0
    %133 = vmatpush1.msra.mxu0 0.0
    %134 = vmatprep.subr.mxu0 0.0
    %135 = vmatpush1.msra.mxu0 0.0
    %136 = vmatprep.subr.mxu0 0.0
    %137 = vmatpush1.msra.mxu0 0.0
    %138 = vmatprep.mubr.f32.mxu0 0.0
    %139 = vmatmul.mubr.f32.gmra.mrb[0].mxu0 %v69
    %v140 = vpop.f32.mrb[0].mxu0
    %v141 = vadd.f32 %v65, %v140
    %v142 = vpop.f32.mrb[0].mxu0
    %143 = vmatprep.mubr.f32.mxu0 0.0
    %144 = vmatmul.mubr.f32.gmra.mrb[0].mxu0 %v72
    %v145 = vpop.f32.mrb[0].mxu0
    %v146 = vadd.f32 %v65, %v145
    %v147 = vpop.f32.mrb[0].mxu0
    %148 = vdwg.mxu0
    %vm149 = vcmask 64512
    %150 = vst.msk [vmem:[#allocation8] sm:$0xff] %vm149, %v141
    %151 = vst.msk [vmem:[#allocation8 + $0x8] sm:$0xff] %vm149, %v146
    // Predicated region
    $region26: #{transformer_forward_pallas.11} parent=1 // pred_check
      _
    $region27: #{transformer_forward_pallas.11} parent=1 // pred_check_branch
      %153 = sbr.rel (0) target = $region29
    $region28: #{transformer_forward_pallas.11} parent=1 // pred_region
      %s155 = ssub.s32 256, 256
      %156 = vsyncadd [#allocation4], %s155
      %s157 = sshll.u32 [#allocation8], 4
      %s158 = int_to_ptr.vmem [resolvable:$true] %s157
      %163 = dma.vmem_to_hbm [thread:$0]  %s158, 256, %s3, [#allocation4], 128, 128, 8
    $region29: #{transformer_forward_pallas.11} parent=1 // pred_fallthru
      _
    // Predicated region
    $region30: #{transformer_forward_pallas.11} parent=1 // pred_check
      _
    $region31: #{transformer_forward_pallas.11} parent=1 // pred_check_branch
      %165 = sbr.rel (0) target = $region33
    $region32: #{transformer_forward_pallas.11} parent=1 // pred_region
      %166 = dma.done [#allocation4], 256
    $region33: #{transformer_forward_pallas.11} parent=1 // pred_fallthru
      _
    %167 = vsyncpa [#allocation3], 1
    %168 = vsyncpa [#allocation6], 1
    %169 = vsyncpa [#allocation4], 1

// kernel: transformer_forward_pallas.7
$region0: #{transformer_forward_pallas.7}
  #allocation0 [shape = 'u32[]', space=smem, size = 0x4, offset = 0x4, fixed_abs, tag = 'smem constant byte address 0x4 - core index']
  #allocation1 [shape = 'u32[144,128]{1,0:T(1,128)}', space=vmem, size = 0x12000, scoped, tag = 'internal scratch']
  %s0 = inlined_call_operand.hbm [shape: f32[2,8,32], index: 0, kind: input, shape index: {}]
  %s1 = inlined_call_operand.hbm [shape: f32[32,96], index: 1, kind: input, shape index: {}]
  %s2 = inlined_call_operand.hbm [shape: f32[1,96], index: 2, kind: input, shape index: {}]
  %s3 = inlined_call_operand.hbm [shape: f32[32,32], index: 3, kind: input, shape index: {}]
  %s4 = inlined_call_operand.hbm [shape: f32[1,32], index: 4, kind: input, shape index: {}]
  %s5 = inlined_call_operand.hbm [shape: f32[2,8,32], index: 5, kind: output, shape index: {}]
  %s6 = sld [smem:[#allocation0]]
  $region73: #{transformer_forward_pallas.7} parent=0
    _
  %s8 = ssub.s32 1, %s6
  %s9 = scalar_select 0, %s8, %s6
  $region1: #{transformer_forward_pallas.7} parent=0
    #allocation2 [shape = 'u8[8192]{0}', space=vmem, size = 0x2000, scoped, tag = 'input window, operand 0']
    #allocation3 [shape = 's32[2]{0}', space=sflag, size = 0x8, scoped, tag = 'scoped memory for transformer_forward_pallas.7']
    #allocation4 [shape = 's32[2]{0}', space=sflag, size = 0x8, scoped, tag = 'scoped memory for transformer_forward_pallas.7']
    #allocation5 [shape = 'u8[16384]{0}', space=vmem, size = 0x4000, scoped, tag = 'input window, operand 1, single buffered']
    #allocation6 [shape = 's32[1]{0}', space=sflag, size = 0x4, scoped, tag = 'scoped memory for transformer_forward_pallas.7']
    #allocation7 [shape = 'u8[512]{0}', space=vmem, size = 0x400, scoped, tag = 'input window, operand 2, single buffered']
    #allocation8 [shape = 'u8[16384]{0}', space=vmem, size = 0x4000, scoped, tag = 'input window, operand 3, single buffered']
    #allocation9 [shape = 's32[1]{0}', space=sflag, size = 0x4, scoped, tag = 'scoped memory for transformer_forward_pallas.7']
    #allocation10 [shape = 'u8[512]{0}', space=vmem, size = 0x400, scoped, tag = 'input window, operand 4, single buffered']
    #allocation11 [shape = 'u8[8192]{0}', space=vmem, size = 0x2000, scoped, tag = 'output window, operand 0']
    %10 = vsyncpa [#allocation3], 0
    %s11 = scalar_lea.sflag [#allocation3], 1
    %12 = vsyncpa %s11, 0
    %13 = vsyncpa [#allocation6], 0
    %14 = vsyncpa [#allocation9], 0
    %15 = vsyncpa [#allocation4], 0
    %s16 = scalar_lea.sflag [#allocation4], 1
    %17 = vsyncpa %s16, 0
    loop: start=0, step=1, limit=4
    $region2: #{transformer_forward_pallas.7} parent=1 // loop_pre_header
      _
    $region3: #{transformer_forward_pallas.7} parent=1 // loop_header
      %s19 = sphi 0, %s23
      %p20 = scmp.ge.s32.totalorder %s19, 4
      %s29 = sphi 0, %s31
      %s32 = sphi 0, %s29
      %s33 = sphi 0, %s32
      %s49 = sphi 0, %s33
      %s53 = sphi 0, %s53
      %s55 = sphi 0, %s53
      %s56 = sphi 0, %s55
      %s70 = sphi 0, %s56
      %s74 = sphi 0, %s74
      %s76 = sphi 0, %s74
      %s77 = sphi 0, %s76
      %s91 = sphi 0, %s77
      %s95 = sphi 0, %s95
      %s97 = sphi 0, %s95
      %s98 = sphi 0, %s97
      %s112 = sphi 0, %s98
      %s116 = sphi 0, %s116
      %s118 = sphi 0, %s116
      %s119 = sphi 0, %s118
      %s133 = sphi 0, %s119
      %s139 = sphi 0, %s141
      %s142 = sphi 0, %s139
      %s143 = sphi 0, %s142
      %s159 = sphi 0, %s143
    $region4: #{transformer_forward_pallas.7} parent=1 // loop_header_branch
      %22 = sbr.rel (%p20) target = $region8
    $region5: #{transformer_forward_pallas.7} parent=1 // loop_body
      %s24 = ssub.s32 %s19, 1
      %s25 = ssub.s32 %s19, 2
      %s26 = sadd.s32 %s19, 1
      %s27 = ssub.s32 %s19, %s26
      %p28 = scmp.eq.s32.totalorder %s27, 0
      %s30 = sadd.s32 %s29, 1
      %s31 = scalar_select %p28, %s29, %s30
      %p34 = pneg %p28
      %p35 = scmp.eq.s32.totalorder %s19, 1
      %p36 = por %p34, %p35
      %p37 = scmp.ne.s32.totalorder %s29, %s32
      %p38 = scmp.eq.s32.totalorder %s19, 0
      %p39 = por %p37, %p38
      %p40 = scmp.ne.s32.totalorder %s29, %s32
      %p41 = scmp.eq.s32.totalorder %s24, 1
      %p42 = por %p40, %p41
      %p43 = scmp.ne.s32.totalorder %s32, %s33
      %p44 = scmp.eq.s32.totalorder %s24, 0
      %p45 = por %p43, %p44
      %p46 = scmp.ne.s32.totalorder %s32, %s33
      %p47 = scmp.eq.s32.totalorder %s25, 1
      %p48 = por %p46, %p47
      %p50 = scmp.ne.s32.totalorder %s33, %s49
      %p51 = scmp.eq.s32.totalorder %s25, 0
      %p52 = por %p50, %p51
      %s54 = sadd.s32 %s53, 1
      %p57 = scmp.eq.s32.totalorder %s19, 1
      %p58 = scmp.ne.s32.totalorder %s53, %s55
      %p59 = scmp.eq.s32.totalorder %s19, 0
      %p60 = por %p58, %p59
      %p61 = scmp.ne.s32.totalorder %s53, %s55
      %p62 = scmp.eq.s32.totalorder %s24, 1
      %p63 = por %p61, %p62
      %p64 = scmp.ne.s32.totalorder %s55, %s56
      %p65 = scmp.eq.s32.totalorder %s24, 0
      %p66 = por %p64, %p65
      %p67 = scmp.ne.s32.totalorder %s55, %s56
      %p68 = scmp.eq.s32.totalorder %s25, 1
      %p69 = por %p67, %p68
      %p71 = scmp.ne.s32.totalorder %s56, %s70
      %p72 = scmp.eq.s32.totalorder %s25, 0
      %p73 = por %p71, %p72
      %s75 = sadd.s32 %s74, 1
      %p78 = scmp.eq.s32.totalorder %s19, 1
      %p79 = scmp.ne.s32.totalorder %s74, %s76
      %p80 = scmp.eq.s32.totalorder %s19, 0
      %p81 = por %p79, %p80
      %p82 = scmp.ne.s32.totalorder %s74, %s76
      %p83 = scmp.eq.s32.totalorder %s24, 1
      %p84 = por %p82, %p83
      %p85 = scmp.ne.s32.totalorder %s76, %s77
      %p86 = scmp.eq.s32.totalorder %s24, 0
      %p87 = por %p85, %p86
      %p88 = scmp.ne.s32.totalorder %s76, %s77
      %p89 = scmp.eq.s32.totalorder %s25, 1
      %p90 = por %p88, %p89
      %p92 = scmp.ne.s32.totalorder %s77, %s91
      %p93 = scmp.eq.s32.totalorder %s25, 0
      %p94 = por %p92, %p93
      %s96 = sadd.s32 %s95, 1
      %p99 = scmp.eq.s32.totalorder %s19, 1
      %p100 = scmp.ne.s32.totalorder %s95, %s97
      %p101 = scmp.eq.s32.totalorder %s19, 0
      %p102 = por %p100, %p101
      %p103 = scmp.ne.s32.totalorder %s95, %s97
      %p104 = scmp.eq.s32.totalorder %s24, 1
      %p105 = por %p103, %p104
      %p106 = scmp.ne.s32.totalorder %s97, %s98
      %p107 = scmp.eq.s32.totalorder %s24, 0
      %p108 = por %p106, %p107
      %p109 = scmp.ne.s32.totalorder %s97, %s98
      %p110 = scmp.eq.s32.totalorder %s25, 1
      %p111 = por %p109, %p110
      %p113 = scmp.ne.s32.totalorder %s98, %s112
      %p114 = scmp.eq.s32.totalorder %s25, 0
      %p115 = por %p113, %p114
      %s117 = sadd.s32 %s116, 1
      %p120 = scmp.eq.s32.totalorder %s19, 1
      %p121 = scmp.ne.s32.totalorder %s116, %s118
      %p122 = scmp.eq.s32.totalorder %s19, 0
      %p123 = por %p121, %p122
      %p124 = scmp.ne.s32.totalorder %s116, %s118
      %p125 = scmp.eq.s32.totalorder %s24, 1
      %p126 = por %p124, %p125
      %p127 = scmp.ne.s32.totalorder %s118, %s119
      %p128 = scmp.eq.s32.totalorder %s24, 0
      %p129 = por %p127, %p128
      %p130 = scmp.ne.s32.totalorder %s118, %s119
      %p131 = scmp.eq.s32.totalorder %s25, 1
      %p132 = por %p130, %p131
      %p134 = scmp.ne.s32.totalorder %s119, %s133
      %p135 = scmp.eq.s32.totalorder %s25, 0
      %p136 = por %p134, %p135
      %s137 = ssub.s32 %s19, %s26
      %p138 = scmp.eq.s32.totalorder %s137, 0
      %s140 = sadd.s32 %s139, 1
      %s141 = scalar_select %p138, %s139, %s140
      %p144 = pneg %p138
      %p145 = scmp.eq.s32.totalorder %s19, 1
      %p146 = por %p144, %p145
      %p147 = scmp.ne.s32.totalorder %s139, %s142
      %p148 = scmp.eq.s32.totalorder %s19, 0
      %p149 = por %p147, %p148
      %p150 = scmp.ne.s32.totalorder %s139, %s142
      %p151 = scmp.eq.s32.totalorder %s24, 1
      %p152 = por %p150, %p151
      %p153 = scmp.ne.s32.totalorder %s142, %s143
      %p154 = scmp.eq.s32.totalorder %s24, 0
      %p155 = por %p153, %p154
      %p156 = scmp.ne.s32.totalorder %s142, %s143
      %p157 = scmp.eq.s32.totalorder %s25, 1
      %p158 = por %p156, %p157
      %p160 = scmp.ne.s32.totalorder %s143, %s159
      %p161 = scmp.eq.s32.totalorder %s25, 0
      %p162 = por %p160, %p161
      %p163 = scmp.le.s32.totalorder 1, %s19
      %p164 = scmp.lt.s32.totalorder %s19, 3
      %p165 = pnand %p163, %p164
      %p166 = pneg %p165
      // Predicated region
      $region9: #{transformer_forward_pallas.7} parent=5 // pred_check
        _
      $region10: #{transformer_forward_pallas.7} parent=5 // pred_check_branch
        %168 = sbr.rel (%p165) target = $region12
      $region11: #{transformer_forward_pallas.7} parent=5 // pred_region
        %s169 = ssub.s32 %s19, 1
        // Predicated region
        $region13: #{transformer_forward_pallas.7} parent=11 // pred_check
          %p170 = pneg %p66
        $region14: #{transformer_forward_pallas.7} parent=11 // pred_check_branch
          %172 = sbr.rel (%p170) target = $region16
        $region15: #{transformer_forward_pallas.7} parent=11 // pred_region
          %s174 = ssub.s32 512, 512
          %175 = vsyncadd [#allocation6], %s174
          %s176 = sshll.u32 [#allocation5], 4
          %s177 = int_to_ptr.vmem [resolvable:$true] %s176
          %182 = dma.hbm_to_vmem [thread:$0]  %s1, 512, %s177, [#allocation6], 128, 128, 8
        $region16: #{transformer_forward_pallas.7} parent=11 // pred_fallthru
          _
        // Predicated region
        $region17: #{transformer_forward_pallas.7} parent=11 // pred_check
          %p183 = pneg %p87
        $region18: #{transformer_forward_pallas.7} parent=11 // pred_check_branch
          %185 = sbr.rel (%p183) target = $region20
        $region19: #{transformer_forward_pallas.7} parent=11 // pred_region
          %s187 = ssub.s32 16, 16
          %188 = vsyncadd [#allocation6], %s187
          %s190 = sshll.u32 [#allocation7], 4
          %s191 = int_to_ptr.vmem [resolvable:$true] %s190
          %193 = dma.hbm_to_vmem [thread:$0]  %s2, 16, %s191, [#allocation6]
        $region20: #{transformer_forward_pallas.7} parent=11 // pred_fallthru
          _
        // Predicated region
        $region21: #{transformer_forward_pallas.7} parent=11 // pred_check
          %p194 = pneg %p108
        $region22: #{transformer_forward_pallas.7} parent=11 // pred_check_branch
          %196 = sbr.rel (%p194) target = $region24
        $region23: #{transformer_forward_pallas.7} parent=11 // pred_region
          %s198 = ssub.s32 512, 512
          %199 = vsyncadd [#allocation9], %s198
          %s200 = sshll.u32 [#allocation8], 4
          %s201 = int_to_ptr.vmem [resolvable:$true] %s200
          %206 = dma.hbm_to_vmem [thread:$0]  %s3, 512, %s201, [#allocation9], 128, 128, 8
        $region24: #{transformer_forward_pallas.7} parent=11 // pred_fallthru
          _
        // Predicated region
        $region25: #{transformer_forward_pallas.7} parent=11 // pred_check
          %p207 = pneg %p129
        $region26: #{transformer_forward_pallas.7} parent=11 // pred_check_branch
          %209 = sbr.rel (%p207) target = $region28
        $region27: #{transformer_forward_pallas.7} parent=11 // pred_region
          %s211 = ssub.s32 16, 16
          %212 = vsyncadd [#allocation9], %s211
          %s214 = sshll.u32 [#allocation10], 4
          %s215 = int_to_ptr.vmem [resolvable:$true] %s214
          %217 = dma.hbm_to_vmem [thread:$0]  %s4, 16, %s215, [#allocation9]
        $region28: #{transformer_forward_pallas.7} parent=11 // pred_fallthru
          _
      $region12: #{transformer_forward_pallas.7} parent=5 // pred_fallthru
        _
      %p218 = scmp.lt.s32.totalorder %s19, 2
      // Predicated region
      $region29: #{transformer_forward_pallas.7} parent=5 // pred_check
        %p219 = pneg %p218
      $region30: #{transformer_forward_pallas.7} parent=5 // pred_check_branch
        %221 = sbr.rel (%p219) target = $region32
      $region31: #{transformer_forward_pallas.7} parent=5 // pred_region
        // Predicated region
        $region33: #{transformer_forward_pallas.7} parent=31 // pred_check
          %p222 = pneg %p39
        $region34: #{transformer_forward_pallas.7} parent=31 // pred_check_branch
          %224 = sbr.rel (%p222) target = $region36
        $region35: #{transformer_forward_pallas.7} parent=31 // pred_region
          %s225 = sand.u32 %s29, 1
          %s226 = scalar_lea.sflag [#allocation3], %s225
          %s227 = sand.u32 %s29, 1
          %s228 = smul.addr %s227, 8
          %s229 = scalar_lea.vmem [#allocation2], %s228
          %s231 = ssub.s32 128, 128
          %232 = vsyncadd %s226, %s231
          %s233 = smul.addr %s19, 128
          %s234 = scalar_lea.hbm %s0, %s233
          %s236 = sshll.u32 %s229, 4
          %s237 = int_to_ptr.vmem [resolvable:$true] %s236
          %239 = dma.hbm_to_vmem [thread:$0]  %s234, 128, %s237, %s226
        $region36: #{transformer_forward_pallas.7} parent=31 // pred_fallthru
          _
      $region32: #{transformer_forward_pallas.7} parent=5 // pred_fallthru
        _
      %p240 = scmp.le.s32.totalorder 1, %s19
      %p241 = scmp.lt.s32.totalorder %s19, 3
      %p242 = pnand %p240, %p241
      %p243 = pneg %p242
      // Predicated region
      $region37: #{transformer_forward_pallas.7} parent=5 // pred_check
        _
      $region38: #{transformer_forward_pallas.7} parent=5 // pred_check_branch
        %245 = sbr.rel (%p242) target = $region40
      $region39: #{transformer_forward_pallas.7} parent=5 // pred_region
        %s246 = ssub.s32 %s19, 1
        %s247 = sand.u32 %s32, 1
        %s248 = scalar_lea.sflag [#allocation3], %s247
        %s249 = sand.u32 %s32, 1
        %s250 = smul.addr %s249, 8
        %s251 = scalar_lea.vmem [#allocation2], %s250
        // Predicated region
        $region41: #{transformer_forward_pallas.7} parent=39 // pred_check
          %p252 = pneg %p45
        $region42: #{transformer_forward_pallas.7} parent=39 // pred_check_branch
          %254 = sbr.rel (%p252) target = $region44
        $region43: #{transformer_forward_pallas.7} parent=39 // pred_region
          %255 = dma.done %s248, 128
        $region44: #{transformer_forward_pallas.7} parent=39 // pred_fallthru
          _
        // Predicated region
        $region45: #{transformer_forward_pallas.7} parent=39 // pred_check
          %p256 = pneg %p66
        $region46: #{transformer_forward_pallas.7} parent=39 // pred_check_branch
          %258 = sbr.rel (%p256) target = $region48
        $region47: #{transformer_forward_pallas.7} parent=39 // pred_region
          %259 = dma.done [#allocation6], 512
        $region48: #{transformer_forward_pallas.7} parent=39 // pred_fallthru
          _
        // Predicated region
        $region49: #{transformer_forward_pallas.7} parent=39 // pred_check
          %p260 = pneg %p87
        $region50: #{transformer_forward_pallas.7} parent=39 // pred_check_branch
          %262 = sbr.rel (%p260) target = $region52
        $region51: #{transformer_forward_pallas.7} parent=39 // pred_region
          %263 = dma.done [#allocation6], 16
        $region52: #{transformer_forward_pallas.7} parent=39 // pred_fallthru
          _
        // Predicated region
        $region53: #{transformer_forward_pallas.7} parent=39 // pred_check
          %p264 = pneg %p108
        $region54: #{transformer_forward_pallas.7} parent=39 // pred_check_branch
          %266 = sbr.rel (%p264) target = $region56
        $region55: #{transformer_forward_pallas.7} parent=39 // pred_region
          %267 = dma.done [#allocation9], 512
        $region56: #{transformer_forward_pallas.7} parent=39 // pred_fallthru
          _
        // Predicated region
        $region57: #{transformer_forward_pallas.7} parent=39 // pred_check
          %p268 = pneg %p129
        $region58: #{transformer_forward_pallas.7} parent=39 // pred_check_branch
          %270 = sbr.rel (%p268) target = $region60
        $region59: #{transformer_forward_pallas.7} parent=39 // pred_region
          %271 = dma.done [#allocation9], 16
        $region60: #{transformer_forward_pallas.7} parent=39 // pred_fallthru
          _
        %s272 = sand.u32 %s32, 1
        %s273 = scalar_lea.sflag [#allocation3], %s272
        %s274 = sand.u32 %s32, 1
        %s275 = smul.addr %s274, 8
        %s276 = scalar_lea.vmem [#allocation2], %s275
        %p277 = pneg %p45
        %p278 = pneg %p42
        %p279 = pneg %p66
        %p280 = pneg %p63
        %p281 = pneg %p87
        %p282 = pneg %p84
        %p283 = pneg %p108
        %p284 = pneg %p105
        %p285 = pneg %p129
        %p286 = pneg %p126
        %p287 = pneg %p155
        %p288 = pneg %p152
        %s289 = sand.u32 %s142, 1
        %s290 = scalar_lea.sflag [#allocation4], %s289
        %s291 = sand.u32 %s142, 1
        %s292 = smul.addr %s291, 8
        %s293 = scalar_lea.vmem [#allocation11], %s292
        %v294 = vld [vmem:[%s251] sm:$0xff]
        %vm295 = vcmask 261120
        %v296 = vsel %vm295, %v294, 0.0
        %297 = vadd.xlane.f32.xlu0 %v296
        %v298 = vpop.xlane.xlu0 %297
        %v299 = vrcp.pop 32.0
        %v300 = vmul.f32 %v298, %v299
        %v301 = vsub.f32 %v294, %v300
        %v302 = vmul.f32 %v301, %v301
        %v303 = vsel %vm295, %v302, 0.0
        %304 = vadd.xlane.f32.xlu0 %v303
        %v305 = vpop.xlane.xlu0 %304
        %v306 = vmul.f32 %v305, %v299
        %v307 = vadd.f32 %v306, 1e-05
        %v308 = vrsqrt.pop %v307
        %v309 = vmul.f32 %v301, %v308
        %v310 = vld [vmem:[#allocation5] sm:$0xff]
        %v311 = vld [vmem:[#allocation5 + $0x8] sm:$0xff]
        %v312 = vld [vmem:[#allocation5 + $0x10] sm:$0xff]
        %v313 = vld [vmem:[#allocation5 + $0x18] sm:$0xff]
        %v314 = vld [vmem:[#allocation7] sm:$0x1]
        %v316 = vlaneseq
        %v317 = vshrl.u32 %v316, 7
        %v318 = vsub.s32 0, %v317
        %v319 = vrot.slane %v314, %v318
        %v322 = vsel %vm295, %v309, 0
        %324 = vmatprep.subr.mxu0 0.0
        %325 = vmatpush1.msra.mxu0 %v310
        %326 = vmatprep.subr.mxu0 0.0
        %327 = vmatpush1.msra.mxu0 %v311
        %328 = vmatprep.subr.mxu0 0.0
        %329 = vmatpush1.msra.mxu0 %v312
        %330 = vmatprep.subr.mxu0 0.0
        %331 = vmatpush1.msra.mxu0 %v313
        %332 = vmatprep.subr.mxu0 0.0
        %333 = vmatpush1.msra.mxu0 0.0
        %334 = vmatprep.subr.mxu0 0.0
        %335 = vmatpush1.msra.mxu0 0.0
        %336 = vmatprep.subr.mxu0 0.0
        %337 = vmatpush1.msra.mxu0 0.0
        %338 = vmatprep.subr.mxu0 0.0
        %339 = vmatpush1.msra.mxu0 0.0
        %340 = vmatprep.subr.mxu0 0.0
        %341 = vmatpush1.msra.mxu0 0.0
        %342 = vmatprep.subr.mxu0 0.0
        %343 = vmatpush1.msra.mxu0 0.0
        %344 = vmatprep.subr.mxu0 0.0
        %345 = vmatpush1.msra.mxu0 0.0
        %346 = vmatprep.subr.mxu0 0.0
        %347 = vmatpush1.msra.mxu0 0.0
        %348 = vmatprep.subr.mxu0 0.0
        %349 = vmatpush1.msra.mxu0 0.0
        %350 = vmatprep.subr.mxu0 0.0
        %351 = vmatpush1.msra.mxu0 0.0
        %352 = vmatprep.subr.mxu0 0.0
        %353 = vmatpush1.msra.mxu0 0.0
        %354 = vmatprep.subr.mxu0 0.0
        %355 = vmatpush1.msra.mxu0 0.0
        %356 = vmatprep.subr.mxu0 0.0
        %357 = vmatpush1.msra.mxu0 0.0
        %358 = vmatprep.subr.mxu0 0.0
        %359 = vmatpush1.msra.mxu0 0.0
        %360 = vmatprep.subr.mxu0 0.0
        %361 = vmatpush1.msra.mxu0 0.0
        %362 = vmatprep.subr.mxu0 0.0
        %363 = vmatpush1.msra.mxu0 0.0
        %364 = vmatprep.subr.mxu0 0.0
        %365 = vmatpush1.msra.mxu0 0.0
        %366 = vmatprep.subr.mxu0 0.0
        %367 = vmatpush1.msra.mxu0 0.0
        %368 = vmatprep.subr.mxu0 0.0
        %369 = vmatpush1.msra.mxu0 0.0
        %370 = vmatprep.subr.mxu0 0.0
        %371 = vmatpush1.msra.mxu0 0.0
        %372 = vmatprep.subr.mxu0 0.0
        %373 = vmatpush1.msra.mxu0 0.0
        %374 = vmatprep.subr.mxu0 0.0
        %375 = vmatpush1.msra.mxu0 0.0
        %376 = vmatprep.subr.mxu0 0.0
        %377 = vmatpush1.msra.mxu0 0.0
        %378 = vmatprep.subr.mxu0 0.0
        %379 = vmatpush1.msra.mxu0 0.0
        %380 = vmatprep.subr.mxu0 0.0
        %381 = vmatpush1.msra.mxu0 0.0
        %382 = vmatprep.subr.mxu0 0.0
        %383 = vmatpush1.msra.mxu0 0.0
        %384 = vmatprep.subr.mxu0 0.0
        %385 = vmatpush1.msra.mxu0 0.0
        %386 = vmatprep.subr.mxu0 0.0
        %387 = vmatpush1.msra.mxu0 0.0
        %388 = vmatprep.mubr.f32.mxu0 0.0
        %389 = vmatmul.mubr.f32.gmra.mrb[0].mxu0 %v322
        %v390 = vpop.f32.mrb[0].mxu0
        %v391 = vadd.f32 %v319, %v390
        %v392 = vpop.f32.mrb[0].mxu0
        %393 = vdwg.mxu0
        %v394 = vmul.f32 %v391, 0.35355338
        %396 = vrot.lane.b32.xlu0 %v391, 96
        %v397 = vpop.permute.xlu0 %396
        %vm398 = vcmask 64512
        %v400 = vsel %vm398, %v394, 0
        %v402 = vsel %vm398, %v397, 0
        %404 = vmatprep.subr.mxu0 0.0
        %405 = vmatpush1.xpose.msra.mxu0 %v402
        %406 = vmatprep.subr.mxu0 0.0
        %407 = vmatpush1.xpose.msra.mxu0 0.0
        %408 = vmatprep.subr.mxu0 0.0
        %409 = vmatpush1.xpose.msra.mxu0 0.0
        %410 = vmatprep.subr.mxu0 0.0
        %411 = vmatpush1.xpose.msra.mxu0 0.0
        %412 = vmatprep.subr.mxu0 0.0
        %413 = vmatpush1.xpose.msra.mxu0 0.0
        %414 = vmatprep.subr.mxu0 0.0
        %415 = vmatpush1.xpose.msra.mxu0 0.0
        %416 = vmatprep.subr.mxu0 0.0
        %417 = vmatpush1.xpose.msra.mxu0 0.0
        %418 = vmatprep.subr.mxu0 0.0
        %419 = vmatpush1.xpose.msra.mxu0 0.0
        %420 = vmatprep.subr.mxu0 0.0
        %421 = vmatpush1.xpose.msra.mxu0 0.0
        %422 = vmatprep.subr.mxu0 0.0
        %423 = vmatpush1.xpose.msra.mxu0 0.0
        %424 = vmatprep.subr.mxu0 0.0
        %425 = vmatpush1.xpose.msra.mxu0 0.0
        %426 = vmatprep.subr.mxu0 0.0
        %427 = vmatpush1.xpose.msra.mxu0 0.0
        %428 = vmatprep.subr.mxu0 0.0
        %429 = vmatpush1.xpose.msra.mxu0 0.0
        %430 = vmatprep.subr.mxu0 0.0
        %431 = vmatpush1.xpose.msra.mxu0 0.0
        %432 = vmatprep.subr.mxu0 0.0
        %433 = vmatpush1.xpose.msra.mxu0 0.0
        %434 = vmatprep.subr.mxu0 0.0
        %435 = vmatpush1.xpose.msra.mxu0 0.0
        %436 = vmatprep.subr.mxu0 0.0
        %437 = vmatpush1.xpose.msra.mxu0 0.0
        %438 = vmatprep.subr.mxu0 0.0
        %439 = vmatpush1.xpose.msra.mxu0 0.0
        %440 = vmatprep.subr.mxu0 0.0
        %441 = vmatpush1.xpose.msra.mxu0 0.0
        %442 = vmatprep.subr.mxu0 0.0
        %443 = vmatpush1.xpose.msra.mxu0 0.0
        %444 = vmatprep.subr.mxu0 0.0
        %445 = vmatpush1.xpose.msra.mxu0 0.0
        %446 = vmatprep.subr.mxu0 0.0
        %447 = vmatpush1.xpose.msra.mxu0 0.0
        %448 = vmatprep.subr.mxu0 0.0
        %449 = vmatpush1.xpose.msra.mxu0 0.0
        %450 = vmatprep.subr.mxu0 0.0
        %451 = vmatpush1.xpose.msra.mxu0 0.0
        %452 = vmatprep.subr.mxu0 0.0
        %453 = vmatpush1.xpose.msra.mxu0 0.0
        %454 = vmatprep.subr.mxu0 0.0
        %455 = vmatpush1.xpose.msra.mxu0 0.0
        %456 = vmatprep.subr.mxu0 0.0
        %457 = vmatpush1.xpose.msra.mxu0 0.0
        %458 = vmatprep.subr.mxu0 0.0
        %459 = vmatpush1.xpose.msra.mxu0 0.0
        %460 = vmatprep.subr.mxu0 0.0
        %461 = vmatpush1.xpose.msra.mxu0 0.0
        %462 = vmatprep.subr.mxu0 0.0
        %463 = vmatpush1.xpose.msra.mxu0 0.0
        %464 = vmatprep.subr.mxu0 0.0
        %465 = vmatpush1.xpose.msra.mxu0 0.0
        %466 = vmatprep.subr.mxu0 0.0
        %467 = vmatpush1.xpose.msra.mxu0 0.0
        %468 = vmatprep.mubr.f32.mxu0 0.0
        %469 = vmatmul.mubr.f32.gmra.mrb[0].mxu0 %v400
        %v470 = vpop.f32.mrb[0].mxu0
        %v471 = vadd.f32 0.0, %v470
        %v472 = vpop.f32.mrb[0].mxu0
        %473 = vdwg.mxu0
        %v474 = vsel %vm398, %v471, -inf
        %475 = vmax.xlane.f32.xlu0 %v474
        %v476 = vpop.xlane.xlu0 %475
        %v477 = vsub.f32 %v471, %v476
        %v478 = vmul.f32 %v477, 1.442695
        %v479 = vpow.pop %v478
        %v480 = vsel %vm398, %v479, 0.0
        %481 = vadd.xlane.f32.xlu0 %v480
        %v482 = vpop.xlane.xlu0 %481
        %v483 = vrcp.pop %v482
        %v484 = vmul.f32 %v482, %v483
        %v485 = vsub.f32 2.0, %v484
        %v486 = vmul.f32 %v483, %v485
        %487 = vrot.lane.b32.xlu0 %v391, 64
        %v488 = vpop.permute.xlu0 %487
        %v491 = vsel %vm398, %v479, 0
        %493 = vmatprep.subr.mxu0 0.0
        %494 = vmatpush1.msra.mxu0 %v488
        %495 = vmatprep.subr.mxu0 0.0
        %496 = vmatpush1.msra.mxu0 0.0
        %497 = vmatprep.subr.mxu0 0.0
        %498 = vmatpush1.msra.mxu0 0.0
        %499 = vmatprep.subr.mxu0 0.0
        %500 = vmatpush1.msra.mxu0 0.0
        %501 = vmatprep.subr.mxu0 0.0
        %502 = vmatpush1.msra.mxu0 0.0
        %503 = vmatprep.subr.mxu0 0.0
        %504 = vmatpush1.msra.mxu0 0.0
        %505 = vmatprep.subr.mxu0 0.0
        %506 = vmatpush1.msra.mxu0 0.0
        %507 = vmatprep.subr.mxu0 0.0
        %508 = vmatpush1.msra.mxu0 0.0
        %509 = vmatprep.subr.mxu0 0.0
        %510 = vmatpush1.msra.mxu0 0.0
        %511 = vmatprep.subr.mxu0 0.0
        %512 = vmatpush1.msra.mxu0 0.0
        %513 = vmatprep.subr.mxu0 0.0
        %514 = vmatpush1.msra.mxu0 0.0
        %515 = vmatprep.subr.mxu0 0.0
        %516 = vmatpush1.msra.mxu0 0.0
        %517 = vmatprep.subr.mxu0 0.0
        %518 = vmatpush1.msra.mxu0 0.0
        %519 = vmatprep.subr.mxu0 0.0
        %520 = vmatpush1.msra.mxu0 0.0
        %521 = vmatprep.subr.mxu0 0.0
        %522 = vmatpush1.msra.mxu0 0.0
        %523 = vmatprep.subr.mxu0 0.0
        %524 = vmatpush1.msra.mxu0 0.0
        %525 = vmatprep.subr.mxu0 0.0
        %526 = vmatpush1.msra.mxu0 0.0
        %527 = vmatprep.subr.mxu0 0.0
        %528 = vmatpush1.msra.mxu0 0.0
        %529 = vmatprep.subr.mxu0 0.0
        %530 = vmatpush1.msra.mxu0 0.0
        %531 = vmatprep.subr.mxu0 0.0
        %532 = vmatpush1.msra.mxu0 0.0
        %533 = vmatprep.subr.mxu0 0.0
        %534 = vmatpush1.msra.mxu0 0.0
        %535 = vmatprep.subr.mxu0 0.0
        %536 = vmatpush1.msra.mxu0 0.0
        %537 = vmatprep.subr.mxu0 0.0
        %538 = vmatpush1.msra.mxu0 0.0
        %539 = vmatprep.subr.mxu0 0.0
        %540 = vmatpush1.msra.mxu0 0.0
        %541 = vmatprep.subr.mxu0 0.0
        %542 = vmatpush1.msra.mxu0 0.0
        %543 = vmatprep.subr.mxu0 0.0
        %544 = vmatpush1.msra.mxu0 0.0
        %545 = vmatprep.subr.mxu0 0.0
        %546 = vmatpush1.msra.mxu0 0.0
        %547 = vmatprep.subr.mxu0 0.0
        %548 = vmatpush1.msra.mxu0 0.0
        %549 = vmatprep.subr.mxu0 0.0
        %550 = vmatpush1.msra.mxu0 0.0
        %551 = vmatprep.subr.mxu0 0.0
        %552 = vmatpush1.msra.mxu0 0.0
        %553 = vmatprep.subr.mxu0 0.0
        %554 = vmatpush1.msra.mxu0 0.0
        %555 = vmatprep.subr.mxu0 0.0
        %556 = vmatpush1.msra.mxu0 0.0
        %557 = vmatprep.mubr.f32.mxu0 0.0
        %558 = vmatmul.mubr.f32.gmra.mrb[0].mxu0 %v491
        %v559 = vpop.f32.mrb[0].mxu0
        %v560 = vadd.f32 0.0, %v559
        %v561 = vpop.f32.mrb[0].mxu0
        %562 = vdwg.mxu0
        %v563 = vmul.f32 %v560, %v486
        %564 = vrot.lane.b32.xlu0 %v394, 120
        %v565 = vpop.permute.xlu0 %564
        %566 = vrot.lane.b32.xlu0 %v391, 88
        %v567 = vpop.permute.xlu0 %566
        %v568 = vsel %vm398, %v565, 0
        %v570 = vsel %vm398, %v567, 0
        %572 = vmatprep.subr.mxu0 0.0
        %573 = vmatpush1.xpose.msra.mxu0 %v570
        %574 = vmatprep.subr.mxu0 0.0
        %575 = vmatpush1.xpose.msra.mxu0 0.0
        %576 = vmatprep.subr.mxu0 0.0
        %577 = vmatpush1.xpose.msra.mxu0 0.0
        %578 = vmatprep.subr.mxu0 0.0
        %579 = vmatpush1.xpose.msra.mxu0 0.0
        %580 = vmatprep.subr.mxu0 0.0
        %581 = vmatpush1.xpose.msra.mxu0 0.0
        %582 = vmatprep.subr.mxu0 0.0
        %583 = vmatpush1.xpose.msra.mxu0 0.0
        %584 = vmatprep.subr.mxu0 0.0
        %585 = vmatpush1.xpose.msra.mxu0 0.0
        %586 = vmatprep.subr.mxu0 0.0
        %587 = vmatpush1.xpose.msra.mxu0 0.0
        %588 = vmatprep.subr.mxu0 0.0
        %589 = vmatpush1.xpose.msra.mxu0 0.0
        %590 = vmatprep.subr.mxu0 0.0
        %591 = vmatpush1.xpose.msra.mxu0 0.0
        %592 = vmatprep.subr.mxu0 0.0
        %593 = vmatpush1.xpose.msra.mxu0 0.0
        %594 = vmatprep.subr.mxu0 0.0
        %595 = vmatpush1.xpose.msra.mxu0 0.0
        %596 = vmatprep.subr.mxu0 0.0
        %597 = vmatpush1.xpose.msra.mxu0 0.0
        %598 = vmatprep.subr.mxu0 0.0
        %599 = vmatpush1.xpose.msra.mxu0 0.0
        %600 = vmatprep.subr.mxu0 0.0
        %601 = vmatpush1.xpose.msra.mxu0 0.0
        %602 = vmatprep.subr.mxu0 0.0
        %603 = vmatpush1.xpose.msra.mxu0 0.0
        %604 = vmatprep.subr.mxu0 0.0
        %605 = vmatpush1.xpose.msra.mxu0 0.0
        %606 = vmatprep.subr.mxu0 0.0
        %607 = vmatpush1.xpose.msra.mxu0 0.0
        %608 = vmatprep.subr.mxu0 0.0
        %609 = vmatpush1.xpose.msra.mxu0 0.0
        %610 = vmatprep.subr.mxu0 0.0
        %611 = vmatpush1.xpose.msra.mxu0 0.0
        %612 = vmatprep.subr.mxu0 0.0
        %613 = vmatpush1.xpose.msra.mxu0 0.0
        %614 = vmatprep.subr.mxu0 0.0
        %615 = vmatpush1.xpose.msra.mxu0 0.0
        %616 = vmatprep.subr.mxu0 0.0
        %617 = vmatpush1.xpose.msra.mxu0 0.0
        %618 = vmatprep.subr.mxu0 0.0
        %619 = vmatpush1.xpose.msra.mxu0 0.0
        %620 = vmatprep.subr.mxu0 0.0
        %621 = vmatpush1.xpose.msra.mxu0 0.0
        %622 = vmatprep.subr.mxu0 0.0
        %623 = vmatpush1.xpose.msra.mxu0 0.0
        %624 = vmatprep.subr.mxu0 0.0
        %625 = vmatpush1.xpose.msra.mxu0 0.0
        %626 = vmatprep.subr.mxu0 0.0
        %627 = vmatpush1.xpose.msra.mxu0 0.0
        %628 = vmatprep.subr.mxu0 0.0
        %629 = vmatpush1.xpose.msra.mxu0 0.0
        %630 = vmatprep.subr.mxu0 0.0
        %631 = vmatpush1.xpose.msra.mxu0 0.0
        %632 = vmatprep.subr.mxu0 0.0
        %633 = vmatpush1.xpose.msra.mxu0 0.0
        %634 = vmatprep.subr.mxu0 0.0
        %635 = vmatpush1.xpose.msra.mxu0 0.0
        %636 = vmatprep.mubr.f32.mxu0 0.0
        %637 = vmatmul.mubr.f32.gmra.mrb[0].mxu0 %v568
        %v638 = vpop.f32.mrb[0].mxu0
        %v639 = vadd.f32 0.0, %v638
        %v640 = vpop.f32.mrb[0].mxu0
        %641 = vdwg.mxu0
        %v642 = vsel %vm398, %v639, -inf
        %643 = vmax.xlane.f32.xlu0 %v642
        %v644 = vpop.xlane.xlu0 %643
        %v645 = vsub.f32 %v639, %v644
        %v646 = vmul.f32 %v645, 1.442695
        %v647 = vpow.pop %v646
        %v648 = vsel %vm398, %v647, 0.0
        %649 = vadd.xlane.f32.xlu0 %v648
        %v650 = vpop.xlane.xlu0 %649
        %v651 = vrcp.pop %v650
        %v652 = vmul.f32 %v650, %v651
        %v653 = vsub.f32 2.0, %v652
        %v654 = vmul.f32 %v651, %v653
        %655 = vrot.lane.b32.xlu0 %v391, 56
        %v656 = vpop.permute.xlu0 %655
        %v659 = vsel %vm398, %v647, 0
        %661 = vmatprep.subr.mxu0 0.0
        %662 = vmatpush1.msra.mxu0 %v656
        %663 = vmatprep.subr.mxu0 0.0
        %664 = vmatpush1.msra.mxu0 0.0
        %665 = vmatprep.subr.mxu0 0.0
        %666 = vmatpush1.msra.mxu0 0.0
        %667 = vmatprep.subr.mxu0 0.0
        %668 = vmatpush1.msra.mxu0 0.0
        %669 = vmatprep.subr.mxu0 0.0
        %670 = vmatpush1.msra.mxu0 0.0
        %671 = vmatprep.subr.mxu0 0.0
        %672 = vmatpush1.msra.mxu0 0.0
        %673 = vmatprep.subr.mxu0 0.0
        %674 = vmatpush1.msra.mxu0 0.0
        %675 = vmatprep.subr.mxu0 0.0
        %676 = vmatpush1.msra.mxu0 0.0
        %677 = vmatprep.subr.mxu0 0.0
        %678 = vmatpush1.msra.mxu0 0.0
        %679 = vmatprep.subr.mxu0 0.0
        %680 = vmatpush1.msra.mxu0 0.0
        %681 = vmatprep.subr.mxu0 0.0
        %682 = vmatpush1.msra.mxu0 0.0
        %683 = vmatprep.subr.mxu0 0.0
        %684 = vmatpush1.msra.mxu0 0.0
        %685 = vmatprep.subr.mxu0 0.0
        %686 = vmatpush1.msra.mxu0 0.0
        %687 = vmatprep.subr.mxu0 0.0
        %688 = vmatpush1.msra.mxu0 0.0
        %689 = vmatprep.subr.mxu0 0.0
        %690 = vmatpush1.msra.mxu0 0.0
        %691 = vmatprep.subr.mxu0 0.0
        %692 = vmatpush1.msra.mxu0 0.0
        %693 = vmatprep.subr.mxu0 0.0
        %694 = vmatpush1.msra.mxu0 0.0
        %695 = vmatprep.subr.mxu0 0.0
        %696 = vmatpush1.msra.mxu0 0.0
        %697 = vmatprep.subr.mxu0 0.0
        %698 = vmatpush1.msra.mxu0 0.0
        %699 = vmatprep.subr.mxu0 0.0
        %700 = vmatpush1.msra.mxu0 0.0
        %701 = vmatprep.subr.mxu0 0.0
        %702 = vmatpush1.msra.mxu0 0.0
        %703 = vmatprep.subr.mxu0 0.0
        %704 = vmatpush1.msra.mxu0 0.0
        %705 = vmatprep.subr.mxu0 0.0
        %706 = vmatpush1.msra.mxu0 0.0
        %707 = vmatprep.subr.mxu0 0.0
        %708 = vmatpush1.msra.mxu0 0.0
        %709 = vmatprep.subr.mxu0 0.0
        %710 = vmatpush1.msra.mxu0 0.0
        %711 = vmatprep.subr.mxu0 0.0
        %712 = vmatpush1.msra.mxu0 0.0
        %713 = vmatprep.subr.mxu0 0.0
        %714 = vmatpush1.msra.mxu0 0.0
        %715 = vmatprep.subr.mxu0 0.0
        %716 = vmatpush1.msra.mxu0 0.0
        %717 = vmatprep.subr.mxu0 0.0
        %718 = vmatpush1.msra.mxu0 0.0
        %719 = vmatprep.subr.mxu0 0.0
        %720 = vmatpush1.msra.mxu0 0.0
        %721 = vmatprep.subr.mxu0 0.0
        %722 = vmatpush1.msra.mxu0 0.0
        %723 = vmatprep.subr.mxu0 0.0
        %724 = vmatpush1.msra.mxu0 0.0
        %725 = vmatprep.mubr.f32.mxu0 0.0
        %726 = vmatmul.mubr.f32.gmra.mrb[0].mxu0 %v659
        %v727 = vpop.f32.mrb[0].mxu0
        %v728 = vadd.f32 0.0, %v727
        %v729 = vpop.f32.mrb[0].mxu0
        %730 = vdwg.mxu0
        %v731 = vmul.f32 %v728, %v654
        %732 = vrot.lane.b32.xlu0 %v394, 112
        %v733 = vpop.permute.xlu0 %732
        %734 = vrot.lane.b32.xlu0 %v391, 80
        %v735 = vpop.permute.xlu0 %734
        %v736 = vsel %vm398, %v733, 0
        %v738 = vsel %vm398, %v735, 0
        %740 = vmatprep.subr.mxu0 0.0
        %741 = vmatpush1.xpose.msra.mxu0 %v738
        %742 = vmatprep.subr.mxu0 0.0
        %743 = vmatpush1.xpose.msra.mxu0 0.0
        %744 = vmatprep.subr.mxu0 0.0
        %745 = vmatpush1.xpose.msra.mxu0 0.0
        %746 = vmatprep.subr.mxu0 0.0
        %747 = vmatpush1.xpose.msra.mxu0 0.0
        %748 = vmatprep.subr.mxu0 0.0
        %749 = vmatpush1.xpose.msra.mxu0 0.0
        %750 = vmatprep.subr.mxu0 0.0
        %751 = vmatpush1.xpose.msra.mxu0 0.0
        %752 = vmatprep.subr.mxu0 0.0
        %753 = vmatpush1.xpose.msra.mxu0 0.0
        %754 = vmatprep.subr.mxu0 0.0
        %755 = vmatpush1.xpose.msra.mxu0 0.0
        %756 = vmatprep.subr.mxu0 0.0
        %757 = vmatpush1.xpose.msra.mxu0 0.0
        %758 = vmatprep.subr.mxu0 0.0
        %759 = vmatpush1.xpose.msra.mxu0 0.0
        %760 = vmatprep.subr.mxu0 0.0
        %761 = vmatpush1.xpose.msra.mxu0 0.0
        %762 = vmatprep.subr.mxu0 0.0
        %763 = vmatpush1.xpose.msra.mxu0 0.0
        %764 = vmatprep.subr.mxu0 0.0
        %765 = vmatpush1.xpose.msra.mxu0 0.0
        %766 = vmatprep.subr.mxu0 0.0
        %767 = vmatpush1.xpose.msra.mxu0 0.0
        %768 = vmatprep.subr.mxu0 0.0
        %769 = vmatpush1.xpose.msra.mxu0 0.0
        %770 = vmatprep.subr.mxu0 0.0
        %771 = vmatpush1.xpose.msra.mxu0 0.0
        %772 = vmatprep.subr.mxu0 0.0
        %773 = vmatpush1.xpose.msra.mxu0 0.0
        %774 = vmatprep.subr.mxu0 0.0
        %775 = vmatpush1.xpose.msra.mxu0 0.0
        %776 = vmatprep.subr.mxu0 0.0
        %777 = vmatpush1.xpose.msra.mxu0 0.0
        %778 = vmatprep.subr.mxu0 0.0
        %779 = vmatpush1.xpose.msra.mxu0 0.0
        %780 = vmatprep.subr.mxu0 0.0
        %781 = vmatpush1.xpose.msra.mxu0 0.0
        %782 = vmatprep.subr.mxu0 0.0
        %783 = vmatpush1.xpose.msra.mxu0 0.0
        %784 = vmatprep.subr.mxu0 0.0
        %785 = vmatpush1.xpose.msra.mxu0 0.0
        %786 = vmatprep.subr.mxu0 0.0
        %787 = vmatpush1.xpose.msra.mxu0 0.0
        %788 = vmatprep.subr.mxu0 0.0
        %789 = vmatpush1.xpose.msra.mxu0 0.0
        %790 = vmatprep.subr.mxu0 0.0
        %791 = vmatpush1.xpose.msra.mxu0 0.0
        %792 = vmatprep.subr.mxu0 0.0
        %793 = vmatpush1.xpose.msra.mxu0 0.0
        %794 = vmatprep.subr.mxu0 0.0
        %795 = vmatpush1.xpose.msra.mxu0 0.0
        %796 = vmatprep.subr.mxu0 0.0
        %797 = vmatpush1.xpose.msra.mxu0 0.0
        %798 = vmatprep.subr.mxu0 0.0
        %799 = vmatpush1.xpose.msra.mxu0 0.0
        %800 = vmatprep.subr.mxu0 0.0
        %801 = vmatpush1.xpose.msra.mxu0 0.0
        %802 = vmatprep.subr.mxu0 0.0
        %803 = vmatpush1.xpose.msra.mxu0 0.0
        %804 = vmatprep.mubr.f32.mxu0 0.0
        %805 = vmatmul.mubr.f32.gmra.mrb[0].mxu0 %v736
        %v806 = vpop.f32.mrb[0].mxu0
        %v807 = vadd.f32 0.0, %v806
        %v808 = vpop.f32.mrb[0].mxu0
        %809 = vdwg.mxu0
        %v810 = vsel %vm398, %v807, -inf
        %811 = vmax.xlane.f32.xlu0 %v810
        %v812 = vpop.xlane.xlu0 %811
        %v813 = vsub.f32 %v807, %v812
        %v814 = vmul.f32 %v813, 1.442695
        %v815 = vpow.pop %v814
        %v816 = vsel %vm398, %v815, 0.0
        %817 = vadd.xlane.f32.xlu0 %v816
        %v818 = vpop.xlane.xlu0 %817
        %v819 = vrcp.pop %v818
        %v820 = vmul.f32 %v818, %v819
        %v821 = vsub.f32 2.0, %v820
        %v822 = vmul.f32 %v819, %v821
        %823 = vrot.lane.b32.xlu0 %v391, 48
        %v824 = vpop.permute.xlu0 %823
        %v827 = vsel %vm398, %v815, 0
        %829 = vmatprep.subr.mxu0 0.0
        %830 = vmatpush1.msra.mxu0 %v824
        %831 = vmatprep.subr.mxu0 0.0
        %832 = vmatpush1.msra.mxu0 0.0
        %833 = vmatprep.subr.mxu0 0.0
        %834 = vmatpush1.msra.mxu0 0.0
        %835 = vmatprep.subr.mxu0 0.0
        %836 = vmatpush1.msra.mxu0 0.0
        %837 = vmatprep.subr.mxu0 0.0
        %838 = vmatpush1.msra.mxu0 0.0
        %839 = vmatprep.subr.mxu0 0.0
        %840 = vmatpush1.msra.mxu0 0.0
        %841 = vmatprep.subr.mxu0 0.0
        %842 = vmatpush1.msra.mxu0 0.0
        %843 = vmatprep.subr.mxu0 0.0
        %844 = vmatpush1.msra.mxu0 0.0
        %845 = vmatprep.subr.mxu0 0.0
        %846 = vmatpush1.msra.mxu0 0.0
        %847 = vmatprep.subr.mxu0 0.0
        %848 = vmatpush1.msra.mxu0 0.0
        %849 = vmatprep.subr.mxu0 0.0
        %850 = vmatpush1.msra.mxu0 0.0
        %851 = vmatprep.subr.mxu0 0.0
        %852 = vmatpush1.msra.mxu0 0.0
        %853 = vmatprep.subr.mxu0 0.0
        %854 = vmatpush1.msra.mxu0 0.0
        %855 = vmatprep.subr.mxu0 0.0
        %856 = vmatpush1.msra.mxu0 0.0
        %857 = vmatprep.subr.mxu0 0.0
        %858 = vmatpush1.msra.mxu0 0.0
        %859 = vmatprep.subr.mxu0 0.0
        %860 = vmatpush1.msra.mxu0 0.0
        %861 = vmatprep.subr.mxu0 0.0
        %862 = vmatpush1.msra.mxu0 0.0
        %863 = vmatprep.subr.mxu0 0.0
        %864 = vmatpush1.msra.mxu0 0.0
        %865 = vmatprep.subr.mxu0 0.0
        %866 = vmatpush1.msra.mxu0 0.0
        %867 = vmatprep.subr.mxu0 0.0
        %868 = vmatpush1.msra.mxu0 0.0
        %869 = vmatprep.subr.mxu0 0.0
        %870 = vmatpush1.msra.mxu0 0.0
        %871 = vmatprep.subr.mxu0 0.0
        %872 = vmatpush1.msra.mxu0 0.0
        %873 = vmatprep.subr.mxu0 0.0
        %874 = vmatpush1.msra.mxu0 0.0
        %875 = vmatprep.subr.mxu0 0.0
        %876 = vmatpush1.msra.mxu0 0.0
        %877 = vmatprep.subr.mxu0 0.0
        %878 = vmatpush1.msra.mxu0 0.0
        %879 = vmatprep.subr.mxu0 0.0
        %880 = vmatpush1.msra.mxu0 0.0
        %881 = vmatprep.subr.mxu0 0.0
        %882 = vmatpush1.msra.mxu0 0.0
        %883 = vmatprep.subr.mxu0 0.0
        %884 = vmatpush1.msra.mxu0 0.0
        %885 = vmatprep.subr.mxu0 0.0
        %886 = vmatpush1.msra.mxu0 0.0
        %887 = vmatprep.subr.mxu0 0.0
        %888 = vmatpush1.msra.mxu0 0.0
        %889 = vmatprep.subr.mxu0 0.0
        %890 = vmatpush1.msra.mxu0 0.0
        %891 = vmatprep.subr.mxu0 0.0
        %892 = vmatpush1.msra.mxu0 0.0
        %893 = vmatprep.mubr.f32.mxu0 0.0
        %894 = vmatmul.mubr.f32.gmra.mrb[0].mxu0 %v827
        %v895 = vpop.f32.mrb[0].mxu0
        %v896 = vadd.f32 0.0, %v895
        %v897 = vpop.f32.mrb[0].mxu0
        %898 = vdwg.mxu0
        %v899 = vmul.f32 %v896, %v822
        %900 = vrot.lane.b32.xlu0 %v394, 104
        %v901 = vpop.permute.xlu0 %900
        %902 = vrot.lane.b32.xlu0 %v391, 72
        %v903 = vpop.permute.xlu0 %902
        %v904 = vsel %vm398, %v901, 0
        %v906 = vsel %vm398, %v903, 0
        %908 = vmatprep.subr.mxu0 0.0
        %909 = vmatpush1.xpose.msra.mxu0 %v906
        %910 = vmatprep.subr.mxu0 0.0
        %911 = vmatpush1.xpose.msra.mxu0 0.0
        %912 = vmatprep.subr.mxu0 0.0
        %913 = vmatpush1.xpose.msra.mxu0 0.0
        %914 = vmatprep.subr.mxu0 0.0
        %915 = vmatpush1.xpose.msra.mxu0 0.0
        %916 = vmatprep.subr.mxu0 0.0
        %917 = vmatpush1.xpose.msra.mxu0 0.0
        %918 = vmatprep.subr.mxu0 0.0
        %919 = vmatpush1.xpose.msra.mxu0 0.0
        %920 = vmatprep.subr.mxu0 0.0
        %921 = vmatpush1.xpose.msra.mxu0 0.0
        %922 = vmatprep.subr.mxu0 0.0
        %923 = vmatpush1.xpose.msra.mxu0 0.0
        %924 = vmatprep.subr.mxu0 0.0
        %925 = vmatpush1.xpose.msra.mxu0 0.0
        %926 = vmatprep.subr.mxu0 0.0
        %927 = vmatpush1.xpose.msra.mxu0 0.0
        %928 = vmatprep.subr.mxu0 0.0
        %929 = vmatpush1.xpose.msra.mxu0 0.0
        %930 = vmatprep.subr.mxu0 0.0
        %931 = vmatpush1.xpose.msra.mxu0 0.0
        %932 = vmatprep.subr.mxu0 0.0
        %933 = vmatpush1.xpose.msra.mxu0 0.0
        %934 = vmatprep.subr.mxu0 0.0
        %935 = vmatpush1.xpose.msra.mxu0 0.0
        %936 = vmatprep.subr.mxu0 0.0
        %937 = vmatpush1.xpose.msra.mxu0 0.0
        %938 = vmatprep.subr.mxu0 0.0
        %939 = vmatpush1.xpose.msra.mxu0 0.0
        %940 = vmatprep.subr.mxu0 0.0
        %941 = vmatpush1.xpose.msra.mxu0 0.0
        %942 = vmatprep.subr.mxu0 0.0
        %943 = vmatpush1.xpose.msra.mxu0 0.0
        %944 = vmatprep.subr.mxu0 0.0
        %945 = vmatpush1.xpose.msra.mxu0 0.0
        %946 = vmatprep.subr.mxu0 0.0
        %947 = vmatpush1.xpose.msra.mxu0 0.0
        %948 = vmatprep.subr.mxu0 0.0
        %949 = vmatpush1.xpose.msra.mxu0 0.0
        %950 = vmatprep.subr.mxu0 0.0
        %951 = vmatpush1.xpose.msra.mxu0 0.0
        %952 = vmatprep.subr.mxu0 0.0
        %953 = vmatpush1.xpose.msra.mxu0 0.0
        %954 = vmatprep.subr.mxu0 0.0
        %955 = vmatpush1.xpose.msra.mxu0 0.0
        %956 = vmatprep.subr.mxu0 0.0
        %957 = vmatpush1.xpose.msra.mxu0 0.0
        %958 = vmatprep.subr.mxu0 0.0
        %959 = vmatpush1.xpose.msra.mxu0 0.0
        %960 = vmatprep.subr.mxu0 0.0
        %961 = vmatpush1.xpose.msra.mxu0 0.0
        %962 = vmatprep.subr.mxu0 0.0
        %963 = vmatpush1.xpose.msra.mxu0 0.0
        %964 = vmatprep.subr.mxu0 0.0
        %965 = vmatpush1.xpose.msra.mxu0 0.0
        %966 = vmatprep.subr.mxu0 0.0
        %967 = vmatpush1.xpose.msra.mxu0 0.0
        %968 = vmatprep.subr.mxu0 0.0
        %969 = vmatpush1.xpose.msra.mxu0 0.0
        %970 = vmatprep.subr.mxu0 0.0
        %971 = vmatpush1.xpose.msra.mxu0 0.0
        %972 = vmatprep.mubr.f32.mxu0 0.0
        %973 = vmatmul.mubr.f32.gmra.mrb[0].mxu0 %v904
        %v974 = vpop.f32.mrb[0].mxu0
        %v975 = vadd.f32 0.0, %v974
        %v976 = vpop.f32.mrb[0].mxu0
        %977 = vdwg.mxu0
        %v978 = vsel %vm398, %v975, -inf
        %979 = vmax.xlane.f32.xlu0 %v978
        %v980 = vpop.xlane.xlu0 %979
        %v981 = vsub.f32 %v975, %v980
        %v982 = vmul.f32 %v981, 1.442695
        %v983 = vpow.pop %v982
        %v984 = vsel %vm398, %v983, 0.0
        %985 = vadd.xlane.f32.xlu0 %v984
        %v986 = vpop.xlane.xlu0 %985
        %v987 = vrcp.pop %v986
        %v988 = vmul.f32 %v986, %v987
        %v989 = vsub.f32 2.0, %v988
        %v990 = vmul.f32 %v987, %v989
        %991 = vrot.lane.b32.xlu0 %v391, 40
        %v992 = vpop.permute.xlu0 %991
        %v995 = vsel %vm398, %v983, 0
        %997 = vmatprep.subr.mxu0 0.0
        %998 = vmatpush1.msra.mxu0 %v992
        %999 = vmatprep.subr.mxu0 0.0
        %1000 = vmatpush1.msra.mxu0 0.0
        %1001 = vmatprep.subr.mxu0 0.0
        %1002 = vmatpush1.msra.mxu0 0.0
        %1003 = vmatprep.subr.mxu0 0.0
        %1004 = vmatpush1.msra.mxu0 0.0
        %1005 = vmatprep.subr.mxu0 0.0
        %1006 = vmatpush1.msra.mxu0 0.0
        %1007 = vmatprep.subr.mxu0 0.0
        %1008 = vmatpush1.msra.mxu0 0.0
        %1009 = vmatprep.subr.mxu0 0.0
        %1010 = vmatpush1.msra.mxu0 0.0
        %1011 = vmatprep.subr.mxu0 0.0
        %1012 = vmatpush1.msra.mxu0 0.0
        %1013 = vmatprep.subr.mxu0 0.0
        %1014 = vmatpush1.msra.mxu0 0.0
        %1015 = vmatprep.subr.mxu0 0.0
        %1016 = vmatpush1.msra.mxu0 0.0
        %1017 = vmatprep.subr.mxu0 0.0
        %1018 = vmatpush1.msra.mxu0 0.0
        %1019 = vmatprep.subr.mxu0 0.0
        %1020 = vmatpush1.msra.mxu0 0.0
        %1021 = vmatprep.subr.mxu0 0.0
        %1022 = vmatpush1.msra.mxu0 0.0
        %1023 = vmatprep.subr.mxu0 0.0
        %1024 = vmatpush1.msra.mxu0 0.0
        %1025 = vmatprep.subr.mxu0 0.0
        %1026 = vmatpush1.msra.mxu0 0.0
        %1027 = vmatprep.subr.mxu0 0.0
        %1028 = vmatpush1.msra.mxu0 0.0
        %1029 = vmatprep.subr.mxu0 0.0
        %1030 = vmatpush1.msra.mxu0 0.0
        %1031 = vmatprep.subr.mxu0 0.0
        %1032 = vmatpush1.msra.mxu0 0.0
        %1033 = vmatprep.subr.mxu0 0.0
        %1034 = vmatpush1.msra.mxu0 0.0
        %1035 = vmatprep.subr.mxu0 0.0
        %1036 = vmatpush1.msra.mxu0 0.0
        %1037 = vmatprep.subr.mxu0 0.0
        %1038 = vmatpush1.msra.mxu0 0.0
        %1039 = vmatprep.subr.mxu0 0.0
        %1040 = vmatpush1.msra.mxu0 0.0
        %1041 = vmatprep.subr.mxu0 0.0
        %1042 = vmatpush1.msra.mxu0 0.0
        %1043 = vmatprep.subr.mxu0 0.0
        %1044 = vmatpush1.msra.mxu0 0.0
        %1045 = vmatprep.subr.mxu0 0.0
        %1046 = vmatpush1.msra.mxu0 0.0
        %1047 = vmatprep.subr.mxu0 0.0
        %1048 = vmatpush1.msra.mxu0 0.0
        %1049 = vmatprep.subr.mxu0 0.0
        %1050 = vmatpush1.msra.mxu0 0.0
        %1051 = vmatprep.subr.mxu0 0.0
        %1052 = vmatpush1.msra.mxu0 0.0
        %1053 = vmatprep.subr.mxu0 0.0
        %1054 = vmatpush1.msra.mxu0 0.0
        %1055 = vmatprep.subr.mxu0 0.0
        %1056 = vmatpush1.msra.mxu0 0.0
        %1057 = vmatprep.subr.mxu0 0.0
        %1058 = vmatpush1.msra.mxu0 0.0
        %1059 = vmatprep.subr.mxu0 0.0
        %1060 = vmatpush1.msra.mxu0 0.0
        %1061 = vmatprep.mubr.f32.mxu0 0.0
        %1062 = vmatmul.mubr.f32.gmra.mrb[0].mxu0 %v995
        %v1063 = vpop.f32.mrb[0].mxu0
        %v1064 = vadd.f32 0.0, %v1063
        %v1065 = vpop.f32.mrb[0].mxu0
        %1066 = vdwg.mxu0
        %v1067 = vmul.f32 %v1064, %v990
        %1069 = vrot.lane.b32.xlu0 %v731, 8
        %v1070 = vpop.permute.xlu0 %1069
        %1073 = vrot.lane.b32.xlu0 %v899, 16
        %v1074 = vpop.permute.xlu0 %1073
        %1077 = vrot.lane.b32.xlu0 %v1067, 24
        %v1078 = vpop.permute.xlu0 %1077
        %v1080 = vsel %vm398, %v563, %v1070
        %vm1081 = vcmask 130048
        %v1082 = vsel %vm1081, %v1080, %v1074
        %vm1083 = vcmask 195584
        %v1084 = vsel %vm1083, %v1082, %v1078
        %v1085 = vld [vmem:[#allocation8] sm:$0xff]
        %v1086 = vld [vmem:[#allocation8 + $0x8] sm:$0xff]
        %v1087 = vld [vmem:[#allocation8 + $0x10] sm:$0xff]
        %v1088 = vld [vmem:[#allocation8 + $0x18] sm:$0xff]
        %v1089 = vld [vmem:[#allocation10] sm:$0x1]
        %v1091 = vlaneseq
        %v1092 = vshrl.u32 %v1091, 7
        %v1093 = vsub.s32 0, %v1092
        %v1094 = vrot.slane %v1089, %v1093
        %v1097 = vsel %vm295, %v1084, 0
        %1099 = vmatprep.subr.mxu0 0.0
        %1100 = vmatpush1.msra.mxu0 %v1085
        %1101 = vmatprep.subr.mxu0 0.0
        %1102 = vmatpush1.msra.mxu0 %v1086
        %1103 = vmatprep.subr.mxu0 0.0
        %1104 = vmatpush1.msra.mxu0 %v1087
        %1105 = vmatprep.subr.mxu0 0.0
        %1106 = vmatpush1.msra.mxu0 %v1088
        %1107 = vmatprep.subr.mxu0 0.0
        %1108 = vmatpush1.msra.mxu0 0.0
        %1109 = vmatprep.subr.mxu0 0.0
        %1110 = vmatpush1.msra.mxu0 0.0
        %1111 = vmatprep.subr.mxu0 0.0
        %1112 = vmatpush1.msra.mxu0 0.0
        %1113 = vmatprep.subr.mxu0 0.0
        %1114 = vmatpush1.msra.mxu0 0.0
        %1115 = vmatprep.subr.mxu0 0.0
        %1116 = vmatpush1.msra.mxu0 0.0
        %1117 = vmatprep.subr.mxu0 0.0
        %1118 = vmatpush1.msra.mxu0 0.0
        %1119 = vmatprep.subr.mxu0 0.0
        %1120 = vmatpush1.msra.mxu0 0.0
        %1121 = vmatprep.subr.mxu0 0.0
        %1122 = vmatpush1.msra.mxu0 0.0
        %1123 = vmatprep.subr.mxu0 0.0
        %1124 = vmatpush1.msra.mxu0 0.0
        %1125 = vmatprep.subr.mxu0 0.0
        %1126 = vmatpush1.msra.mxu0 0.0
        %1127 = vmatprep.subr.mxu0 0.0
        %1128 = vmatpush1.msra.mxu0 0.0
        %1129 = vmatprep.subr.mxu0 0.0
        %1130 = vmatpush1.msra.mxu0 0.0
        %1131 = vmatprep.subr.mxu0 0.0
        %1132 = vmatpush1.msra.mxu0 0.0
        %1133 = vmatprep.subr.mxu0 0.0
        %1134 = vmatpush1.msra.mxu0 0.0
        %1135 = vmatprep.subr.mxu0 0.0
        %1136 = vmatpush1.msra.mxu0 0.0
        %1137 = vmatprep.subr.mxu0 0.0
        %1138 = vmatpush1.msra.mxu0 0.0
        %1139 = vmatprep.subr.mxu0 0.0
        %1140 = vmatpush1.msra.mxu0 0.0
        %1141 = vmatprep.subr.mxu0 0.0
        %1142 = vmatpush1.msra.mxu0 0.0
        %1143 = vmatprep.subr.mxu0 0.0
        %1144 = vmatpush1.msra.mxu0 0.0
        %1145 = vmatprep.subr.mxu0 0.0
        %1146 = vmatpush1.msra.mxu0 0.0
        %1147 = vmatprep.subr.mxu0 0.0
        %1148 = vmatpush1.msra.mxu0 0.0
        %1149 = vmatprep.subr.mxu0 0.0
        %1150 = vmatpush1.msra.mxu0 0.0
        %1151 = vmatprep.subr.mxu0 0.0
        %1152 = vmatpush1.msra.mxu0 0.0
        %1153 = vmatprep.subr.mxu0 0.0
        %1154 = vmatpush1.msra.mxu0 0.0
        %1155 = vmatprep.subr.mxu0 0.0
        %1156 = vmatpush1.msra.mxu0 0.0
        %1157 = vmatprep.subr.mxu0 0.0
        %1158 = vmatpush1.msra.mxu0 0.0
        %1159 = vmatprep.subr.mxu0 0.0
        %1160 = vmatpush1.msra.mxu0 0.0
        %1161 = vmatprep.subr.mxu0 0.0
        %1162 = vmatpush1.msra.mxu0 0.0
        %1163 = vmatprep.mubr.f32.mxu0 0.0
        %1164 = vmatmul.mubr.f32.gmra.mrb[0].mxu0 %v1097
        %v1165 = vpop.f32.mrb[0].mxu0
        %v1166 = vadd.f32 %v1094, %v1165
        %v1167 = vpop.f32.mrb[0].mxu0
        %1168 = vdwg.mxu0
        %v1169 = vadd.f32 %v294, %v1166
        %1170 = vst.msk [vmem:[%s293] sm:$0xff] %vm295, %v1169
        %s1171 = sand.u32 %s142, 1
        %s1172 = scalar_lea.sflag [#allocation4], %s1171
        %s1173 = sand.u32 %s142, 1
        %s1174 = smul.addr %s1173, 8
        %s1175 = scalar_lea.vmem [#allocation11], %s1174
        // Predicated region
        $region61: #{transformer_forward_pallas.7} parent=39 // pred_check
          %p1176 = pneg %p152
        $region62: #{transformer_forward_pallas.7} parent=39 // pred_check_branch
          %1178 = sbr.rel (%p1176) target = $region64
        $region63: #{transformer_forward_pallas.7} parent=39 // pred_region
          %s1180 = ssub.s32 128, 128
          %1181 = vsyncadd %s1172, %s1180
          %s1182 = smul.addr %s24, 128
          %s1183 = scalar_lea.hbm %s5, %s1182
          %s1185 = sshll.u32 %s1175, 4
          %s1186 = int_to_ptr.vmem [resolvable:$true] %s1185
          %1188 = dma.vmem_to_hbm [thread:$0]  %s1186, 128, %s1183, %s1172
        $region64: #{transformer_forward_pallas.7} parent=39 // pred_fallthru
          _
      $region40: #{transformer_forward_pallas.7} parent=5 // pred_fallthru
        _
      %p1189 = scmp.le.s32.totalorder 2, %s19
      // Predicated region
      $region65: #{transformer_forward_pallas.7} parent=5 // pred_check
        %p1190 = pneg %p1189
      $region66: #{transformer_forward_pallas.7} parent=5 // pred_check_branch
        %1192 = sbr.rel (%p1190) target = $region68
      $region67: #{transformer_forward_pallas.7} parent=5 // pred_region
        %s1193 = ssub.s32 %s19, 2
        // Predicated region
        $region69: #{transformer_forward_pallas.7} parent=67 // pred_check
          %p1194 = pneg %p158
        $region70: #{transformer_forward_pallas.7} parent=67 // pred_check_branch
          %1196 = sbr.rel (%p1194) target = $region72
        $region71: #{transformer_forward_pallas.7} parent=67 // pred_region
          %s1197 = sand.u32 %s143, 1
          %s1198 = scalar_lea.sflag [#allocation4], %s1197
          %s1199 = sand.u32 %s143, 1
          %s1200 = smul.addr %s1199, 8
          %s1201 = scalar_lea.vmem [#allocation11], %s1200
          %1202 = dma.done %s1198, 128
        $region72: #{transformer_forward_pallas.7} parent=67 // pred_fallthru
          _
      $region68: #{transformer_forward_pallas.7} parent=5 // pred_fallthru
        _
    $region6: #{transformer_forward_pallas.7} parent=1 // loop_footer
      %s23 = sadd.s32 1, %s19
    $region7: #{transformer_forward_pallas.7} parent=1 // loop_footer_branch
      %18 = sbr.rel target = $region3
    $region8: #{transformer_forward_pallas.7} parent=1 // loop_exit
      _
    %1203 = vsyncpa [#allocation3], 1
    %s1204 = scalar_lea.sflag [#allocation3], 1
    %1205 = vsyncpa %s1204, 1
    %1206 = vsyncpa [#allocation6], 1
    %1207 = vsyncpa [#allocation9], 1
    %1208 = vsyncpa [#allocation4], 1
    %s1209 = scalar_lea.sflag [#allocation4], 1
    %1210 = vsyncpa %s1209, 1

</llo_original>
